<compile_context>
chip_gen: v7x
topology: tpu7x:2x2x1
jax: 0.10.0
libtpu: 0.0.40
codegen_flags: <defaults>
</compile_context>

<pallas_src>
import math

import jax
import jax.numpy as jnp
from jax.experimental import pallas as pl
from jax.experimental.pallas import tpu as pltpu

M = 256        # batch (test size; any multiple of TM works)
D = 32         # feature dim (must be even)
H = 32         # coupling-net hidden dim
N_FLOWS = 4
DH = D // 2
TM = 128       # batch tile (lane width -> full-width vregs/stores)
LOG_2PI = math.log(2.0 * math.pi)


# ---------------------------------------------------------------------------
# Fused Pallas kernel (transposed, batch-on-lanes layout)
# ---------------------------------------------------------------------------
def nf_fused_kernel(x_ref, w1_ref, b1_ref, w2_ref, b2_ref, zs_ref, stats_ref):
    """Per grid step: x_t tile (D, TM) -> zs_t tile (N_FLOWS+1, D, TM),
    stats tile (2, TM) = [ldj; prior_log_prob].

    Packed weights (per flow k), all zero-padded so the conditioning lanes
    stay identity and contribute 0 to ldj:
      w1_ref[k] : (H, D)    columns of the non-conditioning half are zero
      b1_ref[k] : (H, 1)
      w2_ref[k] : (2D, H)   rows [trans] hold s-weights, rows [D+trans] hold t
      b2_ref[k] : (2D, 1)
    """
    z = x_ref[...]                                    # (D, TM), lives in vregs
    zs_ref[0] = z
    ldj = jnp.zeros((1, TM), dtype=jnp.float32)

    # Static unroll over the (small) number of flows; weights stay VMEM-resident.
    for k in range(N_FLOWS):
        h = jnp.tanh(
            jnp.dot(w1_ref[k], z, preferred_element_type=jnp.float32)
            + b1_ref[k]
        )                                             # (H, TM)
        st = (jnp.dot(w2_ref[k], h, preferred_element_type=jnp.float32)
              + b2_ref[k])                            # (2D, TM), one MXU op for s & t
        s = st[:D, :]                                 # sublane slice (multiple of 8)
        t = st[D:, :]
        z = z * jnp.exp(s) + t                        # identity on conditioning rows
        ldj = ldj + jnp.sum(s, axis=0, keepdims=True)
        zs_ref[k + 1] = z

    plp = (-0.5 * jnp.sum(z * z, axis=0, keepdims=True)
           - (0.5 * D) * LOG_2PI)                     # (1, TM)
    stats_ref[...] = jnp.concatenate([ldj, plp], axis=0)   # single lane-dense store


# ---------------------------------------------------------------------------
# Wrapper
# ---------------------------------------------------------------------------
@jax.jit
def normalizing_flow_model_forward(x, w1p, b1p, w2p, b2p):
    """Mirrors NormalizingFlowModel.forward.

    Returns (zs, prior_log_prob, log_det_jacobian) with
      zs: (N_FLOWS + 1, m, D), prior_log_prob: (m,), log_det_jacobian: (m,)
    """
    m = x.shape[0]
    x_t = x.T                                          # (D, m): batch on lanes

    flops = 2 * m * N_FLOWS * (D * H + 2 * D * H)
    transcendentals = N_FLOWS * m * (H + D)            # tanh + exp
    bytes_accessed = 4 * (m * D * (N_FLOWS + 2) + 2 * m
                          + N_FLOWS * (H * D + H + 2 * D * H + 2 * D))

    zs_t, stats = pl.pallas_call(
        nf_fused_kernel,
        out_shape=(
            jax.ShapeDtypeStruct((N_FLOWS + 1, D, m), jnp.float32),
            jax.ShapeDtypeStruct((2, m), jnp.float32),
        ),
        grid=(pl.cdiv(m, TM),),
        in_specs=[
            pl.BlockSpec((D, TM), lambda i: (0, i)),                 # x_t batch tile
            pl.BlockSpec((N_FLOWS, H, D), lambda i: (0, 0, 0)),      # weights: resident
            pl.BlockSpec((N_FLOWS, H, 1), lambda i: (0, 0, 0)),
            pl.BlockSpec((N_FLOWS, 2 * D, H), lambda i: (0, 0, 0)),
            pl.BlockSpec((N_FLOWS, 2 * D, 1), lambda i: (0, 0, 0)),
        ],
        out_specs=(
            pl.BlockSpec((N_FLOWS + 1, D, TM), lambda i: (0, 0, i)),
            pl.BlockSpec((2, TM), lambda i: (0, i)),
        ),
        compiler_params=pltpu.CompilerParams(
            dimension_semantics=("parallel",),
        ),
        cost_estimate=pl.CostEstimate(
            flops=flops,
            transcendentals=transcendentals,
            bytes_accessed=bytes_accessed,
        ),
    )(x_t, w1p, b1p, w2p, b2p)

    zs = jnp.transpose(zs_t, (0, 2, 1))                # back to (N_FLOWS+1, m, D)
    ldj = stats[0]
    plp = stats[1]
    return zs, plp, ldj


# ---------------------------------------------------------------------------
# Parameter init (original layout) and one-time lane-aligned packing
# ---------------------------------------------------------------------------
def init_params(key):
    """Deterministic parameter init for N_FLOWS coupling layers (torch-like)."""
    params = []
    for k in range(N_FLOWS):
        kk = jax.random.fold_in(key, k)
        k1, k2 = jax.random.split(kk)
        w1 = 0.1 * jax.random.normal(k1, (DH, H), dtype=jnp.float32)
        b1 = jnp.zeros((1, H), dtype=jnp.float32)
        w2 = 0.1 * jax.random.normal(k2, (H, D), dtype=jnp.float32)
        b2 = jnp.zeros((1, D), dtype=jnp.float32)
        params.append((w1, b1, w2, b2))
    return params


def pack_params(params):
    """Pack per-flow params into stacked, transposed, zero-padded tensors.

    NOTE: correctness of the identity on conditioning lanes (and of ldj)
    relies on the zero padding; if these tensors are ever updated by an
    optimizer, re-apply this packing (or mask gradients) every step.
    """
    W1, B1, W2, B2 = [], [], [], []
    for k, (w1, b1, w2, b2) in enumerate(params):
        if k % 2 == 0:
            cond, trans = slice(0, DH), slice(DH, D)   # even: transform 2nd half
        else:
            cond, trans = slice(DH, D), slice(0, DH)   # odd: transform 1st half
        t_rows = slice(D + trans.start, D + trans.stop)

        w1t = jnp.zeros((H, D), jnp.float32).at[:, cond].set(w1.T)
        b1t = b1.T                                                   # (H, 1)
        w2st = jnp.zeros((2 * D, H), jnp.float32)
        w2st = w2st.at[trans, :].set(w2[:, :DH].T)                   # s weights
        w2st = w2st.at[t_rows, :].set(w2[:, DH:].T)                  # t weights
        b2st = jnp.zeros((2 * D, 1), jnp.float32)
        b2st = b2st.at[trans, 0].set(b2[0, :DH])
        b2st = b2st.at[t_rows, 0].set(b2[0, DH:])

        W1.append(w1t); B1.append(b1t); W2.append(w2st); B2.append(b2st)
    return (jnp.stack(W1), jnp.stack(B1), jnp.stack(W2), jnp.stack(B2))


# ---------------------------------------------------------------------------
# Pure-JAX reference (uses the ORIGINAL unpacked params) for a sanity check
# ---------------------------------------------------------------------------
def reference_forward(x, params):
    m = x.shape[0]
    ldj_tot = jnp.zeros((m,), dtype=jnp.float32)
    z = x
    zs = [z]
    for k, (w1, b1, w2, b2) in enumerate(params):
        zi = jnp.roll(z, DH, axis=1) if k % 2 == 1 else z
        x1, x2 = zi[:, :DH], zi[:, DH:]
        h = jnp.tanh(x1 @ w1 + b1)
        st = h @ w2 + b2
        s, t = st[:, :DH], st[:, DH:]
        zo = jnp.concatenate([x1, x2 * jnp.exp(s) + t], axis=1)
        if k % 2 == 1:
            zo = jnp.roll(zo, -DH, axis=1)
        z = zo
        ldj_tot = ldj_tot + jnp.sum(s, axis=1)
        zs.append(z)
    zs = jnp.stack(zs)
    plp = jnp.sum(-0.5 * zs[-1] ** 2 - 0.5 * LOG_2PI, axis=1)
    return zs, plp, ldj_tot


if __name__ == "__main__":
    key = jax.random.PRNGKey(0)
    kx, kp = jax.random.split(key)
    x = jax.random.normal(kx, (M, D), dtype=jnp.float32)
    params = init_params(kp)
    packed = pack_params(params)

    zs, plp, ldj = normalizing_flow_model_forward(x, *packed)
    jax.block_until_ready((zs, plp, ldj))

    zs_r, plp_r, ldj_r = reference_forward(x, params)
    assert zs.shape == (N_FLOWS + 1, M, D)
    assert plp.shape == (M,) and ldj.shape == (M,)
    assert jnp.allclose(zs, zs_r, atol=1e-4, rtol=1e-4)
    assert jnp.allclose(plp, plp_r, atol=1e-4, rtol=1e-4)
    assert jnp.allclose(ldj, ldj_r, atol=1e-4, rtol=1e-4)

    print("KERNEL_OK")
</pallas_src>

<mosaic_0001>
module attributes {stable_mosaic.version = 11 : i64} {
  func.func @nf_fused_kernel(%arg0: i32, %arg1: memref<32x128xf32, #tpu.memory_space<vmem>>, %arg2: memref<4x32x32xf32, #tpu.memory_space<vmem>>, %arg3: memref<4x32x1xf32, #tpu.memory_space<vmem>>, %arg4: memref<4x64x32xf32, #tpu.memory_space<vmem>>, %arg5: memref<4x64x1xf32, #tpu.memory_space<vmem>>, %arg6: memref<5x32x128xf32, #tpu.memory_space<vmem>>, %arg7: memref<2x128xf32, #tpu.memory_space<vmem>>) attributes {dimension_semantics = [#tpu.dimension_semantics<parallel>], iteration_bounds = array<i64: 2>, scalar_prefetch = 0 : i64, scratch_operands = 0 : i64, tpu.core_type = #tpu.core_type<tc>, window_params = [{transform_indices = @transform_0, window_bounds = array<i64: 32, 128>}, {pipeline_mode = #tpu.pipeline_mode<synchronous>, transform_indices = @transform_1, window_bounds = array<i64: 4, 32, 32>}, {pipeline_mode = #tpu.pipeline_mode<synchronous>, transform_indices = @transform_2, window_bounds = array<i64: 4, 32, 1>}, {pipeline_mode = #tpu.pipeline_mode<synchronous>, transform_indices = @transform_3, window_bounds = array<i64: 4, 64, 32>}, {pipeline_mode = #tpu.pipeline_mode<synchronous>, transform_indices = @transform_4, window_bounds = array<i64: 4, 64, 1>}, {transform_indices = @transform_5, window_bounds = array<i64: 5, 32, 128>}, {transform_indices = @transform_6, window_bounds = array<i64: 2, 128>}]} {
    %c0 = arith.constant 0 : index
    %c0_0 = arith.constant 0 : index
    %0 = vector.load %arg1[%c0, %c0_0] : memref<32x128xf32, #tpu.memory_space<vmem>>, vector<32x128xf32>
    %c0_1 = arith.constant 0 : index
    %c0_2 = arith.constant 0 : index
    %c0_3 = arith.constant 0 : index
    %1 = vector.load %arg6[%c0_1, %c0_2, %c0_3] : memref<5x32x128xf32, #tpu.memory_space<vmem>>, vector<1x32x128xf32>
    %2 = vector.shape_cast %1 : vector<1x32x128xf32> to vector<32x128xf32>
    %3 = vector.shape_cast %0 : vector<32x128xf32> to vector<1x32x128xf32>
    tpu.vector_store %arg6[%c0_1, %c0_2, %c0_3], %3 {strides = array<i32>} : memref<5x32x128xf32, #tpu.memory_space<vmem>>, vector<1x32x128xf32>,
    %cst = arith.constant 0.000000e+00 : f32
    %4 = vector.broadcast %cst : f32 to vector<1x128xf32>
    %c0_4 = arith.constant 0 : index
    %c0_5 = arith.constant 0 : index
    %c0_6 = arith.constant 0 : index
    %5 = vector.load %arg2[%c0_4, %c0_5, %c0_6] : memref<4x32x32xf32, #tpu.memory_space<vmem>>, vector<1x32x32xf32>
    %6 = vector.shape_cast %5 : vector<1x32x32xf32> to vector<32x32xf32>
    %cst_7 = arith.constant dense<0.000000e+00> : vector<32x128xf32>
    %7 = tpu.matmul %6, %0, %cst_7 {dimension_numbers = #tpu.dot_dimension_numbers<[1], [0], [0], [1], [0, 0, 1, 1], [], []>} : vector<32x32xf32>, vector<32x128xf32>, vector<32x128xf32> -> vector<32x128xf32>
    %c0_8 = arith.constant 0 : index
    %c0_9 = arith.constant 0 : index
    %c0_10 = arith.constant 0 : index
    %8 = vector.load %arg3[%c0_8, %c0_9, %c0_10] : memref<4x32x1xf32, #tpu.memory_space<vmem>>, vector<1x32x1xf32>
    %9 = vector.shape_cast %8 : vector<1x32x1xf32> to vector<32x1xf32>
    %10 = vector.broadcast %9 : vector<32x1xf32> to vector<32x128xf32>
    %11 = arith.addf %7, %10 : vector<32x128xf32>
    %12 = math.tanh %11 : vector<32x128xf32>
    %c0_11 = arith.constant 0 : index
    %c0_12 = arith.constant 0 : index
    %c0_13 = arith.constant 0 : index
    %13 = vector.load %arg4[%c0_11, %c0_12, %c0_13] : memref<4x64x32xf32, #tpu.memory_space<vmem>>, vector<1x64x32xf32>
    %14 = vector.shape_cast %13 : vector<1x64x32xf32> to vector<64x32xf32>
    %cst_14 = arith.constant dense<0.000000e+00> : vector<64x128xf32>
    %15 = tpu.matmul %14, %12, %cst_14 {dimension_numbers = #tpu.dot_dimension_numbers<[1], [0], [0], [1], [0, 0, 1, 1], [], []>} : vector<64x32xf32>, vector<32x128xf32>, vector<64x128xf32> -> vector<64x128xf32>
    %c0_15 = arith.constant 0 : index
    %c0_16 = arith.constant 0 : index
    %c0_17 = arith.constant 0 : index
    %16 = vector.load %arg5[%c0_15, %c0_16, %c0_17] : memref<4x64x1xf32, #tpu.memory_space<vmem>>, vector<1x64x1xf32>
    %17 = vector.shape_cast %16 : vector<1x64x1xf32> to vector<64x1xf32>
    %18 = vector.broadcast %17 : vector<64x1xf32> to vector<64x128xf32>
    %19 = arith.addf %15, %18 : vector<64x128xf32>
    %20 = vector.extract_strided_slice %19 {offsets = [0, 0], sizes = [32, 128], strides = [1, 1]} : vector<64x128xf32> to vector<32x128xf32>
    %21 = vector.extract_strided_slice %19 {offsets = [32, 0], sizes = [32, 128], strides = [1, 1]} : vector<64x128xf32> to vector<32x128xf32>
    %22 = math.exp %20 : vector<32x128xf32>
    %23 = arith.mulf %0, %22 : vector<32x128xf32>
    %24 = arith.addf %23, %21 : vector<32x128xf32>
    %cst_18 = arith.constant dense<0.000000e+00> : vector<128xf32>
    %25 = vector.multi_reduction <add>, %20, %cst_18 [0] : vector<32x128xf32> to vector<128xf32>
    %26 = vector.shape_cast %25 : vector<128xf32> to vector<1x128xf32>
    %27 = arith.addf %4, %26 : vector<1x128xf32>
    %c1 = arith.constant 1 : index
    %c0_19 = arith.constant 0 : index
    %c0_20 = arith.constant 0 : index
    %28 = vector.load %arg6[%c1, %c0_19, %c0_20] : memref<5x32x128xf32, #tpu.memory_space<vmem>>, vector<1x32x128xf32>
    %29 = vector.shape_cast %28 : vector<1x32x128xf32> to vector<32x128xf32>
    %30 = vector.shape_cast %24 : vector<32x128xf32> to vector<1x32x128xf32>
    tpu.vector_store %arg6[%c1, %c0_19, %c0_20], %30 {strides = array<i32>} : memref<5x32x128xf32, #tpu.memory_space<vmem>>, vector<1x32x128xf32>,
    %c1_21 = arith.constant 1 : index
    %c0_22 = arith.constant 0 : index
    %c0_23 = arith.constant 0 : index
    %31 = vector.load %arg2[%c1_21, %c0_22, %c0_23] : memref<4x32x32xf32, #tpu.memory_space<vmem>>, vector<1x32x32xf32>
    %32 = vector.shape_cast %31 : vector<1x32x32xf32> to vector<32x32xf32>
    %cst_24 = arith.constant dense<0.000000e+00> : vector<32x128xf32>
    %33 = tpu.matmul %32, %24, %cst_24 {dimension_numbers = #tpu.dot_dimension_numbers<[1], [0], [0], [1], [0, 0, 1, 1], [], []>} : vector<32x32xf32>, vector<32x128xf32>, vector<32x128xf32> -> vector<32x128xf32>
    %c1_25 = arith.constant 1 : index
    %c0_26 = arith.constant 0 : index
    %c0_27 = arith.constant 0 : index
    %34 = vector.load %arg3[%c1_25, %c0_26, %c0_27] : memref<4x32x1xf32, #tpu.memory_space<vmem>>, vector<1x32x1xf32>
    %35 = vector.shape_cast %34 : vector<1x32x1xf32> to vector<32x1xf32>
    %36 = vector.broadcast %35 : vector<32x1xf32> to vector<32x128xf32>
    %37 = arith.addf %33, %36 : vector<32x128xf32>
    %38 = math.tanh %37 : vector<32x128xf32>
    %c1_28 = arith.constant 1 : index
    %c0_29 = arith.constant 0 : index
    %c0_30 = arith.constant 0 : index
    %39 = vector.load %arg4[%c1_28, %c0_29, %c0_30] : memref<4x64x32xf32, #tpu.memory_space<vmem>>, vector<1x64x32xf32>
    %40 = vector.shape_cast %39 : vector<1x64x32xf32> to vector<64x32xf32>
    %cst_31 = arith.constant dense<0.000000e+00> : vector<64x128xf32>
    %41 = tpu.matmul %40, %38, %cst_31 {dimension_numbers = #tpu.dot_dimension_numbers<[1], [0], [0], [1], [0, 0, 1, 1], [], []>} : vector<64x32xf32>, vector<32x128xf32>, vector<64x128xf32> -> vector<64x128xf32>
    %c1_32 = arith.constant 1 : index
    %c0_33 = arith.constant 0 : index
    %c0_34 = arith.constant 0 : index
    %42 = vector.load %arg5[%c1_32, %c0_33, %c0_34] : memref<4x64x1xf32, #tpu.memory_space<vmem>>, vector<1x64x1xf32>
    %43 = vector.shape_cast %42 : vector<1x64x1xf32> to vector<64x1xf32>
    %44 = vector.broadcast %43 : vector<64x1xf32> to vector<64x128xf32>
    %45 = arith.addf %41, %44 : vector<64x128xf32>
    %46 = vector.extract_strided_slice %45 {offsets = [0, 0], sizes = [32, 128], strides = [1, 1]} : vector<64x128xf32> to vector<32x128xf32>
    %47 = vector.extract_strided_slice %45 {offsets = [32, 0], sizes = [32, 128], strides = [1, 1]} : vector<64x128xf32> to vector<32x128xf32>
    %48 = math.exp %46 : vector<32x128xf32>
    %49 = arith.mulf %24, %48 : vector<32x128xf32>
    %50 = arith.addf %49, %47 : vector<32x128xf32>
    %cst_35 = arith.constant dense<0.000000e+00> : vector<128xf32>
    %51 = vector.multi_reduction <add>, %46, %cst_35 [0] : vector<32x128xf32> to vector<128xf32>
    %52 = vector.shape_cast %51 : vector<128xf32> to vector<1x128xf32>
    %53 = arith.addf %27, %52 : vector<1x128xf32>
    %c2 = arith.constant 2 : index
    %c0_36 = arith.constant 0 : index
    %c0_37 = arith.constant 0 : index
    %54 = vector.load %arg6[%c2, %c0_36, %c0_37] : memref<5x32x128xf32, #tpu.memory_space<vmem>>, vector<1x32x128xf32>
    %55 = vector.shape_cast %54 : vector<1x32x128xf32> to vector<32x128xf32>
    %56 = vector.shape_cast %50 : vector<32x128xf32> to vector<1x32x128xf32>
    tpu.vector_store %arg6[%c2, %c0_36, %c0_37], %56 {strides = array<i32>} : memref<5x32x128xf32, #tpu.memory_space<vmem>>, vector<1x32x128xf32>,
    %c2_38 = arith.constant 2 : index
    %c0_39 = arith.constant 0 : index
    %c0_40 = arith.constant 0 : index
    %57 = vector.load %arg2[%c2_38, %c0_39, %c0_40] : memref<4x32x32xf32, #tpu.memory_space<vmem>>, vector<1x32x32xf32>
    %58 = vector.shape_cast %57 : vector<1x32x32xf32> to vector<32x32xf32>
    %cst_41 = arith.constant dense<0.000000e+00> : vector<32x128xf32>
    %59 = tpu.matmul %58, %50, %cst_41 {dimension_numbers = #tpu.dot_dimension_numbers<[1], [0], [0], [1], [0, 0, 1, 1], [], []>} : vector<32x32xf32>, vector<32x128xf32>, vector<32x128xf32> -> vector<32x128xf32>
    %c2_42 = arith.constant 2 : index
    %c0_43 = arith.constant 0 : index
    %c0_44 = arith.constant 0 : index
    %60 = vector.load %arg3[%c2_42, %c0_43, %c0_44] : memref<4x32x1xf32, #tpu.memory_space<vmem>>, vector<1x32x1xf32>
    %61 = vector.shape_cast %60 : vector<1x32x1xf32> to vector<32x1xf32>
    %62 = vector.broadcast %61 : vector<32x1xf32> to vector<32x128xf32>
    %63 = arith.addf %59, %62 : vector<32x128xf32>
    %64 = math.tanh %63 : vector<32x128xf32>
    %c2_45 = arith.constant 2 : index
    %c0_46 = arith.constant 0 : index
    %c0_47 = arith.constant 0 : index
    %65 = vector.load %arg4[%c2_45, %c0_46, %c0_47] : memref<4x64x32xf32, #tpu.memory_space<vmem>>, vector<1x64x32xf32>
    %66 = vector.shape_cast %65 : vector<1x64x32xf32> to vector<64x32xf32>
    %cst_48 = arith.constant dense<0.000000e+00> : vector<64x128xf32>
    %67 = tpu.matmul %66, %64, %cst_48 {dimension_numbers = #tpu.dot_dimension_numbers<[1], [0], [0], [1], [0, 0, 1, 1], [], []>} : vector<64x32xf32>, vector<32x128xf32>, vector<64x128xf32> -> vector<64x128xf32>
    %c2_49 = arith.constant 2 : index
    %c0_50 = arith.constant 0 : index
    %c0_51 = arith.constant 0 : index
    %68 = vector.load %arg5[%c2_49, %c0_50, %c0_51] : memref<4x64x1xf32, #tpu.memory_space<vmem>>, vector<1x64x1xf32>
    %69 = vector.shape_cast %68 : vector<1x64x1xf32> to vector<64x1xf32>
    %70 = vector.broadcast %69 : vector<64x1xf32> to vector<64x128xf32>
    %71 = arith.addf %67, %70 : vector<64x128xf32>
    %72 = vector.extract_strided_slice %71 {offsets = [0, 0], sizes = [32, 128], strides = [1, 1]} : vector<64x128xf32> to vector<32x128xf32>
    %73 = vector.extract_strided_slice %71 {offsets = [32, 0], sizes = [32, 128], strides = [1, 1]} : vector<64x128xf32> to vector<32x128xf32>
    %74 = math.exp %72 : vector<32x128xf32>
    %75 = arith.mulf %50, %74 : vector<32x128xf32>
    %76 = arith.addf %75, %73 : vector<32x128xf32>
    %cst_52 = arith.constant dense<0.000000e+00> : vector<128xf32>
    %77 = vector.multi_reduction <add>, %72, %cst_52 [0] : vector<32x128xf32> to vector<128xf32>
    %78 = vector.shape_cast %77 : vector<128xf32> to vector<1x128xf32>
    %79 = arith.addf %53, %78 : vector<1x128xf32>
    %c3 = arith.constant 3 : index
    %c0_53 = arith.constant 0 : index
    %c0_54 = arith.constant 0 : index
    %80 = vector.load %arg6[%c3, %c0_53, %c0_54] : memref<5x32x128xf32, #tpu.memory_space<vmem>>, vector<1x32x128xf32>
    %81 = vector.shape_cast %80 : vector<1x32x128xf32> to vector<32x128xf32>
    %82 = vector.shape_cast %76 : vector<32x128xf32> to vector<1x32x128xf32>
    tpu.vector_store %arg6[%c3, %c0_53, %c0_54], %82 {strides = array<i32>} : memref<5x32x128xf32, #tpu.memory_space<vmem>>, vector<1x32x128xf32>,
    %c3_55 = arith.constant 3 : index
    %c0_56 = arith.constant 0 : index
    %c0_57 = arith.constant 0 : index
    %83 = vector.load %arg2[%c3_55, %c0_56, %c0_57] : memref<4x32x32xf32, #tpu.memory_space<vmem>>, vector<1x32x32xf32>
    %84 = vector.shape_cast %83 : vector<1x32x32xf32> to vector<32x32xf32>
    %cst_58 = arith.constant dense<0.000000e+00> : vector<32x128xf32>
    %85 = tpu.matmul %84, %76, %cst_58 {dimension_numbers = #tpu.dot_dimension_numbers<[1], [0], [0], [1], [0, 0, 1, 1], [], []>} : vector<32x32xf32>, vector<32x128xf32>, vector<32x128xf32> -> vector<32x128xf32>
    %c3_59 = arith.constant 3 : index
    %c0_60 = arith.constant 0 : index
    %c0_61 = arith.constant 0 : index
    %86 = vector.load %arg3[%c3_59, %c0_60, %c0_61] : memref<4x32x1xf32, #tpu.memory_space<vmem>>, vector<1x32x1xf32>
    %87 = vector.shape_cast %86 : vector<1x32x1xf32> to vector<32x1xf32>
    %88 = vector.broadcast %87 : vector<32x1xf32> to vector<32x128xf32>
    %89 = arith.addf %85, %88 : vector<32x128xf32>
    %90 = math.tanh %89 : vector<32x128xf32>
    %c3_62 = arith.constant 3 : index
    %c0_63 = arith.constant 0 : index
    %c0_64 = arith.constant 0 : index
    %91 = vector.load %arg4[%c3_62, %c0_63, %c0_64] : memref<4x64x32xf32, #tpu.memory_space<vmem>>, vector<1x64x32xf32>
    %92 = vector.shape_cast %91 : vector<1x64x32xf32> to vector<64x32xf32>
    %cst_65 = arith.constant dense<0.000000e+00> : vector<64x128xf32>
    %93 = tpu.matmul %92, %90, %cst_65 {dimension_numbers = #tpu.dot_dimension_numbers<[1], [0], [0], [1], [0, 0, 1, 1], [], []>} : vector<64x32xf32>, vector<32x128xf32>, vector<64x128xf32> -> vector<64x128xf32>
    %c3_66 = arith.constant 3 : index
    %c0_67 = arith.constant 0 : index
    %c0_68 = arith.constant 0 : index
    %94 = vector.load %arg5[%c3_66, %c0_67, %c0_68] : memref<4x64x1xf32, #tpu.memory_space<vmem>>, vector<1x64x1xf32>
    %95 = vector.shape_cast %94 : vector<1x64x1xf32> to vector<64x1xf32>
    %96 = vector.broadcast %95 : vector<64x1xf32> to vector<64x128xf32>
    %97 = arith.addf %93, %96 : vector<64x128xf32>
    %98 = vector.extract_strided_slice %97 {offsets = [0, 0], sizes = [32, 128], strides = [1, 1]} : vector<64x128xf32> to vector<32x128xf32>
    %99 = vector.extract_strided_slice %97 {offsets = [32, 0], sizes = [32, 128], strides = [1, 1]} : vector<64x128xf32> to vector<32x128xf32>
    %100 = math.exp %98 : vector<32x128xf32>
    %101 = arith.mulf %76, %100 : vector<32x128xf32>
    %102 = arith.addf %101, %99 : vector<32x128xf32>
    %cst_69 = arith.constant dense<0.000000e+00> : vector<128xf32>
    %103 = vector.multi_reduction <add>, %98, %cst_69 [0] : vector<32x128xf32> to vector<128xf32>
    %104 = vector.shape_cast %103 : vector<128xf32> to vector<1x128xf32>
    %105 = arith.addf %79, %104 : vector<1x128xf32>
    %c4 = arith.constant 4 : index
    %c0_70 = arith.constant 0 : index
    %c0_71 = arith.constant 0 : index
    %106 = vector.load %arg6[%c4, %c0_70, %c0_71] : memref<5x32x128xf32, #tpu.memory_space<vmem>>, vector<1x32x128xf32>
    %107 = vector.shape_cast %106 : vector<1x32x128xf32> to vector<32x128xf32>
    %108 = vector.shape_cast %102 : vector<32x128xf32> to vector<1x32x128xf32>
    tpu.vector_store %arg6[%c4, %c0_70, %c0_71], %108 {strides = array<i32>} : memref<5x32x128xf32, #tpu.memory_space<vmem>>, vector<1x32x128xf32>,
    %109 = arith.mulf %102, %102 : vector<32x128xf32>
    %cst_72 = arith.constant dense<0.000000e+00> : vector<128xf32>
    %110 = vector.multi_reduction <add>, %109, %cst_72 [0] : vector<32x128xf32> to vector<128xf32>
    %111 = vector.shape_cast %110 : vector<128xf32> to vector<1x128xf32>
    %cst_73 = arith.constant -5.000000e-01 : f32
    %112 = vector.broadcast %cst_73 : f32 to vector<1x128xf32>
    %113 = arith.mulf %112, %111 : vector<1x128xf32>
    %cst_74 = arith.constant 29.4060326 : f32
    %114 = vector.broadcast %cst_74 : f32 to vector<1x128xf32>
    %115 = arith.subf %113, %114 : vector<1x128xf32>
    %116 = tpu.concatenate %105, %115 in 0 : vector<1x128xf32>, vector<1x128xf32> -> vector<2x128xf32>
    %c0_75 = arith.constant 0 : index
    %c0_76 = arith.constant 0 : index
    %117 = vector.load %arg7[%c0_75, %c0_76] : memref<2x128xf32, #tpu.memory_space<vmem>>, vector<2x128xf32>
    tpu.vector_store %arg7[%c0_75, %c0_76], %116 {strides = array<i32>} : memref<2x128xf32, #tpu.memory_space<vmem>>, vector<2x128xf32>,
    return
  }
  func.func @transform_0(%arg0: i32) -> (i32, i32) {
    %c0_i32 = arith.constant 0 : i32
    %c0_i32_0 = arith.constant 0 : i32
    return %c0_i32, %arg0 : i32, i32
  }
  func.func @transform_1(%arg0: i32) -> (i32, i32, i32) {
    %c0_i32 = arith.constant 0 : i32
    %c0_i32_0 = arith.constant 0 : i32
    %c0_i32_1 = arith.constant 0 : i32
    %c0_i32_2 = arith.constant 0 : i32
    return %c0_i32, %c0_i32_0, %c0_i32_1 : i32, i32, i32
  }
  func.func @transform_2(%arg0: i32) -> (i32, i32, i32) {
    %c0_i32 = arith.constant 0 : i32
    %c0_i32_0 = arith.constant 0 : i32
    %c0_i32_1 = arith.constant 0 : i32
    %c0_i32_2 = arith.constant 0 : i32
    return %c0_i32, %c0_i32_0, %c0_i32_1 : i32, i32, i32
  }
  func.func @transform_3(%arg0: i32) -> (i32, i32, i32) {
    %c0_i32 = arith.constant 0 : i32
    %c0_i32_0 = arith.constant 0 : i32
    %c0_i32_1 = arith.constant 0 : i32
    %c0_i32_2 = arith.constant 0 : i32
    return %c0_i32, %c0_i32_0, %c0_i32_1 : i32, i32, i32
  }
  func.func @transform_4(%arg0: i32) -> (i32, i32, i32) {
    %c0_i32 = arith.constant 0 : i32
    %c0_i32_0 = arith.constant 0 : i32
    %c0_i32_1 = arith.constant 0 : i32
    %c0_i32_2 = arith.constant 0 : i32
    return %c0_i32, %c0_i32_0, %c0_i32_1 : i32, i32, i32
  }
  func.func @transform_5(%arg0: i32) -> (i32, i32, i32) {
    %c0_i32 = arith.constant 0 : i32
    %c0_i32_0 = arith.constant 0 : i32
    %c0_i32_1 = arith.constant 0 : i32
    return %c0_i32, %c0_i32_0, %arg0 : i32, i32, i32
  }
  func.func @transform_6(%arg0: i32) -> (i32, i32) {
    %c0_i32 = arith.constant 0 : i32
    %c0_i32_0 = arith.constant 0 : i32
    return %c0_i32, %arg0 : i32, i32
  }
}

</mosaic_0001>

<llo_original>
// kernel: normalizing_flow_model_forward.1
$region0: #{normalizing_flow_model_forward.1}
  #allocation0 [shape = 'u32[]', space=smem, size = 0x4, offset = 0x4, fixed_abs, tag = 'smem constant byte address 0x4 - core index']
  #allocation1 [shape = 'u32[144,128]{1,0:T(1,128)}', space=vmem, size = 0x12000, scoped, tag = 'internal scratch']
  %s0 = inlined_call_operand.vmem [shape: f32[32,256], index: 0, kind: input, shape index: {}]
  %s1 = inlined_call_operand.vmem [shape: f32[4,32,32], index: 1, kind: input, shape index: {}]
  %s2 = inlined_call_operand.vmem [shape: f32[4,32,1], index: 2, kind: input, shape index: {}]
  %s3 = inlined_call_operand.vmem [shape: f32[4,64,32], index: 3, kind: input, shape index: {}]
  %s4 = inlined_call_operand.vmem [shape: f32[4,64,1], index: 4, kind: input, shape index: {}]
  %s5 = inlined_call_operand.hbm [shape: f32[5,32,256], index: 5, kind: output, shape index: {0}]
  %s6 = inlined_call_operand.vmem [shape: f32[2,256], index: 6, kind: output, shape index: {1}]
  %7 = xla_tuple %s5, %s6
  %s8 = sld [smem:[#allocation0]]
  $region99: #{normalizing_flow_model_forward.1} parent=0
    _
  %s10 = ssub.s32 1, %s8
  %s11 = scalar_select 0, %s10, %s8
  $region1: #{normalizing_flow_model_forward.1} parent=0
    #allocation2 [shape = 'u8[32768]{0}', space=vmem, size = 0x8000, scoped, tag = 'input window, operand 0']
    #allocation3 [shape = 'u8[163840]{0}', space=vmem, size = 0x28000, scoped, tag = 'output window, operand 0']
    #allocation4 [shape = 's32[2]{0}', space=sflag, size = 0x8, scoped, tag = 'scoped memory for normalizing_flow_model_forward.1']
    %12 = vsyncpa [#allocation4], 0
    %s13 = scalar_lea.sflag [#allocation4], 1
    %14 = vsyncpa %s13, 0
    loop: start=0, step=1, limit=4
    $region2: #{normalizing_flow_model_forward.1} parent=1 // loop_pre_header
      _
    $region3: #{normalizing_flow_model_forward.1} parent=1 // loop_header
      %s16 = sphi 0, %s20
      %p17 = scmp.ge.s32.totalorder %s16, 4
      %s26 = sphi 0, %s28
      %s29 = sphi 0, %s26
      %s30 = sphi 0, %s29
      %s46 = sphi 0, %s30
      %s50 = sphi 0, %s50
      %s52 = sphi 0, %s50
      %s53 = sphi 0, %s52
      %s67 = sphi 0, %s53
      %s71 = sphi 0, %s71
      %s73 = sphi 0, %s71
      %s74 = sphi 0, %s73
      %s88 = sphi 0, %s74
      %s92 = sphi 0, %s92
      %s94 = sphi 0, %s92
      %s95 = sphi 0, %s94
      %s109 = sphi 0, %s95
      %s113 = sphi 0, %s113
      %s115 = sphi 0, %s113
      %s116 = sphi 0, %s115
      %s130 = sphi 0, %s116
      %s136 = sphi 0, %s138
      %s139 = sphi 0, %s136
      %s140 = sphi 0, %s139
      %s156 = sphi 0, %s140
      %s162 = sphi 0, %s164
      %s165 = sphi 0, %s162
      %s166 = sphi 0, %s165
      %s182 = sphi 0, %s166
    $region4: #{normalizing_flow_model_forward.1} parent=1 // loop_header_branch
      %19 = sbr.rel (%p17) target = $region8
    $region5: #{normalizing_flow_model_forward.1} parent=1 // loop_body
      %s21 = ssub.s32 %s16, 1
      %s22 = ssub.s32 %s16, 2
      %s23 = sadd.s32 %s16, 1
      %s24 = ssub.s32 %s16, %s23
      %p25 = scmp.eq.s32.totalorder %s24, 0
      %s27 = sadd.s32 %s26, 1
      %s28 = scalar_select %p25, %s26, %s27
      %p31 = pneg %p25
      %p32 = scmp.eq.s32.totalorder %s16, 1
      %p33 = por %p31, %p32
      %p34 = scmp.ne.s32.totalorder %s26, %s29
      %p35 = scmp.eq.s32.totalorder %s16, 0
      %p36 = por %p34, %p35
      %p37 = scmp.ne.s32.totalorder %s26, %s29
      %p38 = scmp.eq.s32.totalorder %s21, 1
      %p39 = por %p37, %p38
      %p40 = scmp.ne.s32.totalorder %s29, %s30
      %p41 = scmp.eq.s32.totalorder %s21, 0
      %p42 = por %p40, %p41
      %p43 = scmp.ne.s32.totalorder %s29, %s30
      %p44 = scmp.eq.s32.totalorder %s22, 1
      %p45 = por %p43, %p44
      %p47 = scmp.ne.s32.totalorder %s30, %s46
      %p48 = scmp.eq.s32.totalorder %s22, 0
      %p49 = por %p47, %p48
      %s51 = sadd.s32 %s50, 1
      %p54 = scmp.eq.s32.totalorder %s16, 1
      %p55 = scmp.ne.s32.totalorder %s50, %s52
      %p56 = scmp.eq.s32.totalorder %s16, 0
      %p57 = por %p55, %p56
      %p58 = scmp.ne.s32.totalorder %s50, %s52
      %p59 = scmp.eq.s32.totalorder %s21, 1
      %p60 = por %p58, %p59
      %p61 = scmp.ne.s32.totalorder %s52, %s53
      %p62 = scmp.eq.s32.totalorder %s21, 0
      %p63 = por %p61, %p62
      %p64 = scmp.ne.s32.totalorder %s52, %s53
      %p65 = scmp.eq.s32.totalorder %s22, 1
      %p66 = por %p64, %p65
      %p68 = scmp.ne.s32.totalorder %s53, %s67
      %p69 = scmp.eq.s32.totalorder %s22, 0
      %p70 = por %p68, %p69
      %s72 = sadd.s32 %s71, 1
      %p75 = scmp.eq.s32.totalorder %s16, 1
      %p76 = scmp.ne.s32.totalorder %s71, %s73
      %p77 = scmp.eq.s32.totalorder %s16, 0
      %p78 = por %p76, %p77
      %p79 = scmp.ne.s32.totalorder %s71, %s73
      %p80 = scmp.eq.s32.totalorder %s21, 1
      %p81 = por %p79, %p80
      %p82 = scmp.ne.s32.totalorder %s73, %s74
      %p83 = scmp.eq.s32.totalorder %s21, 0
      %p84 = por %p82, %p83
      %p85 = scmp.ne.s32.totalorder %s73, %s74
      %p86 = scmp.eq.s32.totalorder %s22, 1
      %p87 = por %p85, %p86
      %p89 = scmp.ne.s32.totalorder %s74, %s88
      %p90 = scmp.eq.s32.totalorder %s22, 0
      %p91 = por %p89, %p90
      %s93 = sadd.s32 %s92, 1
      %p96 = scmp.eq.s32.totalorder %s16, 1
      %p97 = scmp.ne.s32.totalorder %s92, %s94
      %p98 = scmp.eq.s32.totalorder %s16, 0
      %p99 = por %p97, %p98
      %p100 = scmp.ne.s32.totalorder %s92, %s94
      %p101 = scmp.eq.s32.totalorder %s21, 1
      %p102 = por %p100, %p101
      %p103 = scmp.ne.s32.totalorder %s94, %s95
      %p104 = scmp.eq.s32.totalorder %s21, 0
      %p105 = por %p103, %p104
      %p106 = scmp.ne.s32.totalorder %s94, %s95
      %p107 = scmp.eq.s32.totalorder %s22, 1
      %p108 = por %p106, %p107
      %p110 = scmp.ne.s32.totalorder %s95, %s109
      %p111 = scmp.eq.s32.totalorder %s22, 0
      %p112 = por %p110, %p111
      %s114 = sadd.s32 %s113, 1
      %p117 = scmp.eq.s32.totalorder %s16, 1
      %p118 = scmp.ne.s32.totalorder %s113, %s115
      %p119 = scmp.eq.s32.totalorder %s16, 0
      %p120 = por %p118, %p119
      %p121 = scmp.ne.s32.totalorder %s113, %s115
      %p122 = scmp.eq.s32.totalorder %s21, 1
      %p123 = por %p121, %p122
      %p124 = scmp.ne.s32.totalorder %s115, %s116
      %p125 = scmp.eq.s32.totalorder %s21, 0
      %p126 = por %p124, %p125
      %p127 = scmp.ne.s32.totalorder %s115, %s116
      %p128 = scmp.eq.s32.totalorder %s22, 1
      %p129 = por %p127, %p128
      %p131 = scmp.ne.s32.totalorder %s116, %s130
      %p132 = scmp.eq.s32.totalorder %s22, 0
      %p133 = por %p131, %p132
      %s134 = ssub.s32 %s16, %s23
      %p135 = scmp.eq.s32.totalorder %s134, 0
      %s137 = sadd.s32 %s136, 1
      %s138 = scalar_select %p135, %s136, %s137
      %p141 = pneg %p135
      %p142 = scmp.eq.s32.totalorder %s16, 1
      %p143 = por %p141, %p142
      %p144 = scmp.ne.s32.totalorder %s136, %s139
      %p145 = scmp.eq.s32.totalorder %s16, 0
      %p146 = por %p144, %p145
      %p147 = scmp.ne.s32.totalorder %s136, %s139
      %p148 = scmp.eq.s32.totalorder %s21, 1
      %p149 = por %p147, %p148
      %p150 = scmp.ne.s32.totalorder %s139, %s140
      %p151 = scmp.eq.s32.totalorder %s21, 0
      %p152 = por %p150, %p151
      %p153 = scmp.ne.s32.totalorder %s139, %s140
      %p154 = scmp.eq.s32.totalorder %s22, 1
      %p155 = por %p153, %p154
      %p157 = scmp.ne.s32.totalorder %s140, %s156
      %p158 = scmp.eq.s32.totalorder %s22, 0
      %p159 = por %p157, %p158
      %s160 = ssub.s32 %s16, %s23
      %p161 = scmp.eq.s32.totalorder %s160, 0
      %s163 = sadd.s32 %s162, 1
      %s164 = scalar_select %p161, %s162, %s163
      %p167 = pneg %p161
      %p168 = scmp.eq.s32.totalorder %s16, 1
      %p169 = por %p167, %p168
      %p170 = scmp.ne.s32.totalorder %s162, %s165
      %p171 = scmp.eq.s32.totalorder %s16, 0
      %p172 = por %p170, %p171
      %p173 = scmp.ne.s32.totalorder %s162, %s165
      %p174 = scmp.eq.s32.totalorder %s21, 1
      %p175 = por %p173, %p174
      %p176 = scmp.ne.s32.totalorder %s165, %s166
      %p177 = scmp.eq.s32.totalorder %s21, 0
      %p178 = por %p176, %p177
      %p179 = scmp.ne.s32.totalorder %s165, %s166
      %p180 = scmp.eq.s32.totalorder %s22, 1
      %p181 = por %p179, %p180
      %p183 = scmp.ne.s32.totalorder %s166, %s182
      %p184 = scmp.eq.s32.totalorder %s22, 0
      %p185 = por %p183, %p184
      %p186 = scmp.le.s32.totalorder 1, %s16
      %p187 = scmp.lt.s32.totalorder %s16, 3
      %p188 = pnand %p186, %p187
      %p189 = pneg %p188
      // Predicated region
      $region9: #{normalizing_flow_model_forward.1} parent=5 // pred_check
        _
      $region10: #{normalizing_flow_model_forward.1} parent=5 // pred_check_branch
        %191 = sbr.rel (%p188) target = $region12
      $region11: #{normalizing_flow_model_forward.1} parent=5 // pred_region
        %s192 = ssub.s32 %s16, 1
        // Predicated region
        $region13: #{normalizing_flow_model_forward.1} parent=11 // pred_check
          %p193 = pneg %p63
        $region14: #{normalizing_flow_model_forward.1} parent=11 // pred_check_branch
          %195 = sbr.rel (%p193) target = $region16
        $region15: #{normalizing_flow_model_forward.1} parent=11 // pred_region
          _
        $region16: #{normalizing_flow_model_forward.1} parent=11 // pred_fallthru
          _
        // Predicated region
        $region17: #{normalizing_flow_model_forward.1} parent=11 // pred_check
          %p196 = pneg %p84
        $region18: #{normalizing_flow_model_forward.1} parent=11 // pred_check_branch
          %198 = sbr.rel (%p196) target = $region20
        $region19: #{normalizing_flow_model_forward.1} parent=11 // pred_region
          _
        $region20: #{normalizing_flow_model_forward.1} parent=11 // pred_fallthru
          _
        // Predicated region
        $region21: #{normalizing_flow_model_forward.1} parent=11 // pred_check
          %p199 = pneg %p105
        $region22: #{normalizing_flow_model_forward.1} parent=11 // pred_check_branch
          %201 = sbr.rel (%p199) target = $region24
        $region23: #{normalizing_flow_model_forward.1} parent=11 // pred_region
          _
        $region24: #{normalizing_flow_model_forward.1} parent=11 // pred_fallthru
          _
        // Predicated region
        $region25: #{normalizing_flow_model_forward.1} parent=11 // pred_check
          %p202 = pneg %p126
        $region26: #{normalizing_flow_model_forward.1} parent=11 // pred_check_branch
          %204 = sbr.rel (%p202) target = $region28
        $region27: #{normalizing_flow_model_forward.1} parent=11 // pred_region
          _
        $region28: #{normalizing_flow_model_forward.1} parent=11 // pred_fallthru
          _
      $region12: #{normalizing_flow_model_forward.1} parent=5 // pred_fallthru
        _
      %p205 = scmp.lt.s32.totalorder %s16, 2
      // Predicated region
      $region29: #{normalizing_flow_model_forward.1} parent=5 // pred_check
        %p206 = pneg %p205
      $region30: #{normalizing_flow_model_forward.1} parent=5 // pred_check_branch
        %208 = sbr.rel (%p206) target = $region32
      $region31: #{normalizing_flow_model_forward.1} parent=5 // pred_region
        // Predicated region
        $region33: #{normalizing_flow_model_forward.1} parent=31 // pred_check
          %p209 = pneg %p36
        $region34: #{normalizing_flow_model_forward.1} parent=31 // pred_check_branch
          %211 = sbr.rel (%p209) target = $region36
        $region35: #{normalizing_flow_model_forward.1} parent=31 // pred_region
          %s212 = sand.u32 %s26, 1
          %s213 = sand.u32 %s26, 1
          %s214 = smul.addr %s213, 32
          %s215 = scalar_lea.vmem [#allocation2], %s214
          %s216 = smul.addr %s16, 8
          %s217 = scalar_lea.vmem %s0, %s216
          // Predicated region
          $region37: #{normalizing_flow_model_forward.1} parent=35 // pred_check
            _
          $region38: #{normalizing_flow_model_forward.1} parent=35 // pred_check_branch
            %219 = sbr.rel (0) target = $region40
          $region39: #{normalizing_flow_model_forward.1} parent=35 // pred_region
            // Predicated region
            $region41: #{normalizing_flow_model_forward.1} parent=39 // pred_check
              _
            $region42: #{normalizing_flow_model_forward.1} parent=39 // pred_check_branch
              %221 = sbr.rel (0) target = $region44
            $region43: #{normalizing_flow_model_forward.1} parent=39 // pred_region
              // Predicated region
              $region56: #{normalizing_flow_model_forward.1} parent=43 // pred_check
                _
              $region57: #{normalizing_flow_model_forward.1} parent=43 // pred_check_branch
                %242 = sbr.rel (0) target = $region59
              $region58: #{normalizing_flow_model_forward.1} parent=43 // pred_region
                loop: start=0, step=1, limit=1
                $region60: #{normalizing_flow_model_forward.1} parent=58 // loop_pre_header
                  _
                $region61: #{normalizing_flow_model_forward.1} parent=58 // loop_header
                  %s244 = sphi 0, %s248
                  %p245 = scmp.ge.s32.totalorder %s244, 1
                  %s249 = sphi %s217, %s217
                  %s250 = sphi %s215, %s215
                $region62: #{normalizing_flow_model_forward.1} parent=58 // loop_header_branch
                  %247 = sbr.rel (%p245) target = $region66
                $region63: #{normalizing_flow_model_forward.1} parent=58 // loop_body
                  %v251 = vld [vmem:[%s249] sm:$0xff]
                  %252 = vst [vmem:[%s250] sm:$0xff] %v251
                  %v253 = vld [vmem:[%s249 + $0x10] sm:$0xff]
                  %254 = vst [vmem:[%s250 + $0x8] sm:$0xff] %v253
                  %v255 = vld [vmem:[%s249 + $0x20] sm:$0xff]
                  %256 = vst [vmem:[%s250 + $0x10] sm:$0xff] %v255
                  %v257 = vld [vmem:[%s249 + $0x30] sm:$0xff]
                  %258 = vst [vmem:[%s250 + $0x18] sm:$0xff] %v257
                $region64: #{normalizing_flow_model_forward.1} parent=58 // loop_footer
                  %s248 = sadd.s32 1, %s244
                $region65: #{normalizing_flow_model_forward.1} parent=58 // loop_footer_branch
                  %243 = sbr.rel target = $region61
                $region66: #{normalizing_flow_model_forward.1} parent=58 // loop_exit
                  _
              $region59: #{normalizing_flow_model_forward.1} parent=43 // pred_fallthru
                _
              // Predicated region
              $region67: #{normalizing_flow_model_forward.1} parent=43 // pred_check
                _
              $region68: #{normalizing_flow_model_forward.1} parent=43 // pred_check_branch
                %260 = sbr.rel target = $region70
              $region69: #{normalizing_flow_model_forward.1} parent=43 // pred_region
                _
              $region70: #{normalizing_flow_model_forward.1} parent=43 // pred_fallthru
                _
            $region44: #{normalizing_flow_model_forward.1} parent=39 // pred_fallthru
              _
            // Predicated region
            $region45: #{normalizing_flow_model_forward.1} parent=39 // pred_check
              _
            $region46: #{normalizing_flow_model_forward.1} parent=39 // pred_check_branch
              %223 = sbr.rel target = $region48
            $region47: #{normalizing_flow_model_forward.1} parent=39 // pred_region
              loop: start=0, step=1, limit=1
              $region49: #{normalizing_flow_model_forward.1} parent=47 // loop_pre_header
                _
              $region50: #{normalizing_flow_model_forward.1} parent=47 // loop_header
                %s226 = sphi 0, %s230
                %p227 = scmp.ge.s32.totalorder %s226, 1
                %s231 = sphi %s217, %s217
                %s232 = sphi %s215, %s215
              $region51: #{normalizing_flow_model_forward.1} parent=47 // loop_header_branch
                %229 = sbr.rel (%p227) target = $region55
              $region52: #{normalizing_flow_model_forward.1} parent=47 // loop_body
                %v233 = vld [vmem:[%s231] sm:$0xff]
                %234 = vst [vmem:[%s232] sm:$0xff] %v233
                %v235 = vld [vmem:[%s231 + $0x10] sm:$0xff]
                %236 = vst [vmem:[%s232 + $0x8] sm:$0xff] %v235
                %v237 = vld [vmem:[%s231 + $0x20] sm:$0xff]
                %238 = vst [vmem:[%s232 + $0x10] sm:$0xff] %v237
                %v239 = vld [vmem:[%s231 + $0x30] sm:$0xff]
                %240 = vst [vmem:[%s232 + $0x18] sm:$0xff] %v239
              $region53: #{normalizing_flow_model_forward.1} parent=47 // loop_footer
                %s230 = sadd.s32 1, %s226
              $region54: #{normalizing_flow_model_forward.1} parent=47 // loop_footer_branch
                %225 = sbr.rel target = $region50
              $region55: #{normalizing_flow_model_forward.1} parent=47 // loop_exit
                _
            $region48: #{normalizing_flow_model_forward.1} parent=39 // pred_fallthru
              _
          $region40: #{normalizing_flow_model_forward.1} parent=35 // pred_fallthru
            _
          %261 = vnop
        $region36: #{normalizing_flow_model_forward.1} parent=31 // pred_fallthru
          _
      $region32: #{normalizing_flow_model_forward.1} parent=5 // pred_fallthru
        _
      %p262 = scmp.le.s32.totalorder 1, %s16
      %p263 = scmp.lt.s32.totalorder %s16, 3
      %p264 = pnand %p262, %p263
      %p265 = pneg %p264
      // Predicated region
      $region71: #{normalizing_flow_model_forward.1} parent=5 // pred_check
        _
      $region72: #{normalizing_flow_model_forward.1} parent=5 // pred_check_branch
        %267 = sbr.rel (%p264) target = $region74
      $region73: #{normalizing_flow_model_forward.1} parent=5 // pred_region
        %s268 = ssub.s32 %s16, 1
        %s269 = sand.u32 %s29, 1
        %s270 = sand.u32 %s29, 1
        %s271 = smul.addr %s270, 32
        %s272 = scalar_lea.vmem [#allocation2], %s271
        // Predicated region
        $region75: #{normalizing_flow_model_forward.1} parent=73 // pred_check
          %p273 = pneg %p42
        $region76: #{normalizing_flow_model_forward.1} parent=73 // pred_check_branch
          %275 = sbr.rel (%p273) target = $region78
        $region77: #{normalizing_flow_model_forward.1} parent=73 // pred_region
          _
        $region78: #{normalizing_flow_model_forward.1} parent=73 // pred_fallthru
          _
        %s276 = sand.u32 %s29, 1
        %s277 = sand.u32 %s29, 1
        %s278 = smul.addr %s277, 32
        %s279 = scalar_lea.vmem [#allocation2], %s278
        %p280 = pneg %p42
        %p281 = pneg %p39
        %p282 = pneg %p63
        %p283 = pneg %p60
        %p284 = pneg %p84
        %p285 = pneg %p81
        %p286 = pneg %p105
        %p287 = pneg %p102
        %p288 = pneg %p126
        %p289 = pneg %p123
        %p290 = pneg %p152
        %p291 = pneg %p149
        %s292 = sand.u32 %s139, 1
        %s293 = scalar_lea.sflag [#allocation4], %s292
        %s294 = sand.u32 %s139, 1
        %s295 = smul.addr %s294, 160
        %s296 = scalar_lea.vmem [#allocation3], %s295
        %p297 = pneg %p178
        %p298 = pneg %p175
        %p299 = scmp.lt.s32.totalorder %s21, 1
        %s300 = scalar_select %p299, %s21, 1
        %s301 = smul.addr %s300, 2
        %s302 = scalar_lea.vmem %s6, %s301
        %p303 = scmp.lt.s32.totalorder %s21, 1
        %s304 = scalar_select %p303, %s21, 1
        %s305 = smul.addr %s304, 2
        %s306 = scalar_lea.vmem %s6, %s305
        %v307 = vld [vmem:[%s272] sm:$0xff]
        %v308 = vld [vmem:[%s272 + $0x8] sm:$0xff]
        %v309 = vld [vmem:[%s272 + $0x10] sm:$0xff]
        %v310 = vld [vmem:[%s272 + $0x18] sm:$0xff]
        %311 = vst [vmem:[%s296] sm:$0xff] %v307
        %312 = vst [vmem:[%s296 + $0x8] sm:$0xff] %v308
        %313 = vst [vmem:[%s296 + $0x10] sm:$0xff] %v309
        %314 = vst [vmem:[%s296 + $0x18] sm:$0xff] %v310
        %v315 = vld [vmem:[%s1] sm:$0xff]
        %v316 = vld [vmem:[%s1 + $0x8] sm:$0xff]
        %v317 = vld [vmem:[%s1 + $0x10] sm:$0xff]
        %v318 = vld [vmem:[%s1 + $0x18] sm:$0xff]
        %v319 = vld [vmem:[%s2] sm:$0xff]
        %v320 = vld [vmem:[%s2 + $0x8] sm:$0xff]
        %v321 = vld [vmem:[%s2 + $0x10] sm:$0xff]
        %v322 = vld [vmem:[%s2 + $0x18] sm:$0xff]
        %324 = vset.pattern.permute.xlu0 0
        %325 = vperm.xlu0 %324, %v319
        %v326 = vpop.permute.xlu0 %325
        %329 = vset.pattern.permute.xlu0 0
        %330 = vperm.xlu0 %329, %v320
        %v331 = vpop.permute.xlu0 %330
        %334 = vset.pattern.permute.xlu0 0
        %335 = vperm.xlu0 %334, %v321
        %v336 = vpop.permute.xlu0 %335
        %339 = vset.pattern.permute.xlu0 0
        %340 = vperm.xlu0 %339, %v322
        %v341 = vpop.permute.xlu0 %340
        %vm343 = vcmask 261120
        %v345 = vsel %vm343, %v315, 0
        %v348 = vsel %vm343, %v316, 0
        %v351 = vsel %vm343, %v317, 0
        %v354 = vsel %vm343, %v318, 0
        %356 = vmatprep.subr.mxu0 0.0
        %357 = vmatpush1.msra.mxu0 %v307
        %358 = vmatprep.subr.mxu0 0.0
        %359 = vmatpush1.msra.mxu0 %v308
        %360 = vmatprep.subr.mxu0 0.0
        %361 = vmatpush1.msra.mxu0 %v309
        %362 = vmatprep.subr.mxu0 0.0
        %363 = vmatpush1.msra.mxu0 %v310
        %364 = vmatprep.subr.mxu0 0.0
        %365 = vmatpush1.msra.mxu0 0.0
        %366 = vmatprep.subr.mxu0 0.0
        %367 = vmatpush1.msra.mxu0 0.0
        %368 = vmatprep.subr.mxu0 0.0
        %369 = vmatpush1.msra.mxu0 0.0
        %370 = vmatprep.subr.mxu0 0.0
        %371 = vmatpush1.msra.mxu0 0.0
        %372 = vmatprep.subr.mxu0 0.0
        %373 = vmatpush1.msra.mxu0 0.0
        %374 = vmatprep.subr.mxu0 0.0
        %375 = vmatpush1.msra.mxu0 0.0
        %376 = vmatprep.subr.mxu0 0.0
        %377 = vmatpush1.msra.mxu0 0.0
        %378 = vmatprep.subr.mxu0 0.0
        %379 = vmatpush1.msra.mxu0 0.0
        %380 = vmatprep.subr.mxu0 0.0
        %381 = vmatpush1.msra.mxu0 0.0
        %382 = vmatprep.subr.mxu0 0.0
        %383 = vmatpush1.msra.mxu0 0.0
        %384 = vmatprep.subr.mxu0 0.0
        %385 = vmatpush1.msra.mxu0 0.0
        %386 = vmatprep.subr.mxu0 0.0
        %387 = vmatpush1.msra.mxu0 0.0
        %388 = vmatprep.subr.mxu0 0.0
        %389 = vmatpush1.msra.mxu0 0.0
        %390 = vmatprep.subr.mxu0 0.0
        %391 = vmatpush1.msra.mxu0 0.0
        %392 = vmatprep.subr.mxu0 0.0
        %393 = vmatpush1.msra.mxu0 0.0
        %394 = vmatprep.subr.mxu0 0.0
        %395 = vmatpush1.msra.mxu0 0.0
        %396 = vmatprep.subr.mxu0 0.0
        %397 = vmatpush1.msra.mxu0 0.0
        %398 = vmatprep.subr.mxu0 0.0
        %399 = vmatpush1.msra.mxu0 0.0
        %400 = vmatprep.subr.mxu0 0.0
        %401 = vmatpush1.msra.mxu0 0.0
        %402 = vmatprep.subr.mxu0 0.0
        %403 = vmatpush1.msra.mxu0 0.0
        %404 = vmatprep.subr.mxu0 0.0
        %405 = vmatpush1.msra.mxu0 0.0
        %406 = vmatprep.subr.mxu0 0.0
        %407 = vmatpush1.msra.mxu0 0.0
        %408 = vmatprep.subr.mxu0 0.0
        %409 = vmatpush1.msra.mxu0 0.0
        %410 = vmatprep.subr.mxu0 0.0
        %411 = vmatpush1.msra.mxu0 0.0
        %412 = vmatprep.subr.mxu0 0.0
        %413 = vmatpush1.msra.mxu0 0.0
        %414 = vmatprep.subr.mxu0 0.0
        %415 = vmatpush1.msra.mxu0 0.0
        %416 = vmatprep.subr.mxu0 0.0
        %417 = vmatpush1.msra.mxu0 0.0
        %418 = vmatprep.subr.mxu0 0.0
        %419 = vmatpush1.msra.mxu0 0.0
        %420 = vmatprep.mubr.f32.mxu0 0.0
        %421 = vmatmul.mubr.f32.gmra.mrb[0].mxu0 %v345
        %v422 = vpop.f32.mrb[0].mxu0
        %v423 = vadd.f32 %v326, %v422
        %v424 = vpop.f32.mrb[0].mxu0
        %425 = vmatprep.mubr.f32.mxu0 0.0
        %426 = vmatmul.mubr.f32.gmra.mrb[0].mxu0 %v348
        %v427 = vpop.f32.mrb[0].mxu0
        %v428 = vadd.f32 %v331, %v427
        %v429 = vpop.f32.mrb[0].mxu0
        %430 = vmatprep.mubr.f32.mxu0 0.0
        %431 = vmatmul.mubr.f32.gmra.mrb[0].mxu0 %v351
        %v432 = vpop.f32.mrb[0].mxu0
        %v433 = vadd.f32 %v336, %v432
        %v434 = vpop.f32.mrb[0].mxu0
        %435 = vmatprep.mubr.f32.mxu0 0.0
        %436 = vmatmul.mubr.f32.gmra.mrb[0].mxu0 %v354
        %v437 = vpop.f32.mrb[0].mxu0
        %v438 = vadd.f32 %v341, %v437
        %v439 = vpop.f32.mrb[0].mxu0
        %440 = vdwg.mxu0
        %v441 = vtanh.pop %v423
        %v442 = vtanh.pop %v428
        %v443 = vtanh.pop %v433
        %v444 = vtanh.pop %v438
        %v445 = vld [vmem:[%s3] sm:$0xff]
        %v446 = vld [vmem:[%s3 + $0x8] sm:$0xff]
        %v447 = vld [vmem:[%s3 + $0x10] sm:$0xff]
        %v448 = vld [vmem:[%s3 + $0x18] sm:$0xff]
        %v449 = vld [vmem:[%s3 + $0x20] sm:$0xff]
        %v450 = vld [vmem:[%s3 + $0x28] sm:$0xff]
        %v451 = vld [vmem:[%s3 + $0x30] sm:$0xff]
        %v452 = vld [vmem:[%s3 + $0x38] sm:$0xff]
        %v453 = vld [vmem:[%s4] sm:$0xff]
        %v454 = vld [vmem:[%s4 + $0x8] sm:$0xff]
        %v455 = vld [vmem:[%s4 + $0x10] sm:$0xff]
        %v456 = vld [vmem:[%s4 + $0x18] sm:$0xff]
        %v457 = vld [vmem:[%s4 + $0x20] sm:$0xff]
        %v458 = vld [vmem:[%s4 + $0x28] sm:$0xff]
        %v459 = vld [vmem:[%s4 + $0x30] sm:$0xff]
        %v460 = vld [vmem:[%s4 + $0x38] sm:$0xff]
        %462 = vset.pattern.permute.xlu0 0
        %463 = vperm.xlu0 %462, %v453
        %v464 = vpop.permute.xlu0 %463
        %467 = vset.pattern.permute.xlu0 0
        %468 = vperm.xlu0 %467, %v454
        %v469 = vpop.permute.xlu0 %468
        %472 = vset.pattern.permute.xlu0 0
        %473 = vperm.xlu0 %472, %v455
        %v474 = vpop.permute.xlu0 %473
        %477 = vset.pattern.permute.xlu0 0
        %478 = vperm.xlu0 %477, %v456
        %v479 = vpop.permute.xlu0 %478
        %482 = vset.pattern.permute.xlu0 0
        %483 = vperm.xlu0 %482, %v457
        %v484 = vpop.permute.xlu0 %483
        %487 = vset.pattern.permute.xlu0 0
        %488 = vperm.xlu0 %487, %v458
        %v489 = vpop.permute.xlu0 %488
        %492 = vset.pattern.permute.xlu0 0
        %493 = vperm.xlu0 %492, %v459
        %v494 = vpop.permute.xlu0 %493
        %497 = vset.pattern.permute.xlu0 0
        %498 = vperm.xlu0 %497, %v460
        %v499 = vpop.permute.xlu0 %498
        %v502 = vsel %vm343, %v445, 0
        %v505 = vsel %vm343, %v446, 0
        %v508 = vsel %vm343, %v447, 0
        %v511 = vsel %vm343, %v448, 0
        %v514 = vsel %vm343, %v449, 0
        %v517 = vsel %vm343, %v450, 0
        %v520 = vsel %vm343, %v451, 0
        %v523 = vsel %vm343, %v452, 0
        %525 = vmatprep.subr.mxu0 0.0
        %526 = vmatpush1.msra.mxu0 %v441
        %527 = vmatprep.subr.mxu0 0.0
        %528 = vmatpush1.msra.mxu0 %v442
        %529 = vmatprep.subr.mxu0 0.0
        %530 = vmatpush1.msra.mxu0 %v443
        %531 = vmatprep.subr.mxu0 0.0
        %532 = vmatpush1.msra.mxu0 %v444
        %533 = vmatprep.subr.mxu0 0.0
        %534 = vmatpush1.msra.mxu0 0.0
        %535 = vmatprep.subr.mxu0 0.0
        %536 = vmatpush1.msra.mxu0 0.0
        %537 = vmatprep.subr.mxu0 0.0
        %538 = vmatpush1.msra.mxu0 0.0
        %539 = vmatprep.subr.mxu0 0.0
        %540 = vmatpush1.msra.mxu0 0.0
        %541 = vmatprep.subr.mxu0 0.0
        %542 = vmatpush1.msra.mxu0 0.0
        %543 = vmatprep.subr.mxu0 0.0
        %544 = vmatpush1.msra.mxu0 0.0
        %545 = vmatprep.subr.mxu0 0.0
        %546 = vmatpush1.msra.mxu0 0.0
        %547 = vmatprep.subr.mxu0 0.0
        %548 = vmatpush1.msra.mxu0 0.0
        %549 = vmatprep.subr.mxu0 0.0
        %550 = vmatpush1.msra.mxu0 0.0
        %551 = vmatprep.subr.mxu0 0.0
        %552 = vmatpush1.msra.mxu0 0.0
        %553 = vmatprep.subr.mxu0 0.0
        %554 = vmatpush1.msra.mxu0 0.0
        %555 = vmatprep.subr.mxu0 0.0
        %556 = vmatpush1.msra.mxu0 0.0
        %557 = vmatprep.subr.mxu0 0.0
        %558 = vmatpush1.msra.mxu0 0.0
        %559 = vmatprep.subr.mxu0 0.0
        %560 = vmatpush1.msra.mxu0 0.0
        %561 = vmatprep.subr.mxu0 0.0
        %562 = vmatpush1.msra.mxu0 0.0
        %563 = vmatprep.subr.mxu0 0.0
        %564 = vmatpush1.msra.mxu0 0.0
        %565 = vmatprep.subr.mxu0 0.0
        %566 = vmatpush1.msra.mxu0 0.0
        %567 = vmatprep.subr.mxu0 0.0
        %568 = vmatpush1.msra.mxu0 0.0
        %569 = vmatprep.subr.mxu0 0.0
        %570 = vmatpush1.msra.mxu0 0.0
        %571 = vmatprep.subr.mxu0 0.0
        %572 = vmatpush1.msra.mxu0 0.0
        %573 = vmatprep.subr.mxu0 0.0
        %574 = vmatpush1.msra.mxu0 0.0
        %575 = vmatprep.subr.mxu0 0.0
        %576 = vmatpush1.msra.mxu0 0.0
        %577 = vmatprep.subr.mxu0 0.0
        %578 = vmatpush1.msra.mxu0 0.0
        %579 = vmatprep.subr.mxu0 0.0
        %580 = vmatpush1.msra.mxu0 0.0
        %581 = vmatprep.subr.mxu0 0.0
        %582 = vmatpush1.msra.mxu0 0.0
        %583 = vmatprep.subr.mxu0 0.0
        %584 = vmatpush1.msra.mxu0 0.0
        %585 = vmatprep.subr.mxu0 0.0
        %586 = vmatpush1.msra.mxu0 0.0
        %587 = vmatprep.subr.mxu0 0.0
        %588 = vmatpush1.msra.mxu0 0.0
        %589 = vmatprep.mubr.f32.mxu0 0.0
        %590 = vmatmul.mubr.f32.gmra.mrb[0].mxu0 %v502
        %v591 = vpop.f32.mrb[0].mxu0
        %v592 = vadd.f32 %v464, %v591
        %v593 = vpop.f32.mrb[0].mxu0
        %594 = vmatprep.mubr.f32.mxu0 0.0
        %595 = vmatmul.mubr.f32.gmra.mrb[0].mxu0 %v505
        %v596 = vpop.f32.mrb[0].mxu0
        %v597 = vadd.f32 %v469, %v596
        %v598 = vpop.f32.mrb[0].mxu0
        %599 = vmatprep.mubr.f32.mxu0 0.0
        %600 = vmatmul.mubr.f32.gmra.mrb[0].mxu0 %v508
        %v601 = vpop.f32.mrb[0].mxu0
        %v602 = vadd.f32 %v474, %v601
        %v603 = vpop.f32.mrb[0].mxu0
        %604 = vmatprep.mubr.f32.mxu0 0.0
        %605 = vmatmul.mubr.f32.gmra.mrb[0].mxu0 %v511
        %v606 = vpop.f32.mrb[0].mxu0
        %v607 = vadd.f32 %v479, %v606
        %v608 = vpop.f32.mrb[0].mxu0
        %609 = vmatprep.mubr.f32.mxu0 0.0
        %610 = vmatmul.mubr.f32.gmra.mrb[0].mxu0 %v514
        %v611 = vpop.f32.mrb[0].mxu0
        %v612 = vadd.f32 %v484, %v611
        %v613 = vpop.f32.mrb[0].mxu0
        %614 = vmatprep.mubr.f32.mxu0 0.0
        %615 = vmatmul.mubr.f32.gmra.mrb[0].mxu0 %v517
        %v616 = vpop.f32.mrb[0].mxu0
        %v617 = vadd.f32 %v489, %v616
        %v618 = vpop.f32.mrb[0].mxu0
        %619 = vmatprep.mubr.f32.mxu0 0.0
        %620 = vmatmul.mubr.f32.gmra.mrb[0].mxu0 %v520
        %v621 = vpop.f32.mrb[0].mxu0
        %v622 = vadd.f32 %v494, %v621
        %v623 = vpop.f32.mrb[0].mxu0
        %624 = vmatprep.mubr.f32.mxu0 0.0
        %625 = vmatmul.mubr.f32.gmra.mrb[0].mxu0 %v523
        %v626 = vpop.f32.mrb[0].mxu0
        %v627 = vadd.f32 %v499, %v626
        %v628 = vpop.f32.mrb[0].mxu0
        %629 = vdwg.mxu0
        %v630 = vmul.f32 %v592, 1.442695
        %v631 = vpow.pop %v630
        %v632 = vmul.f32 %v597, 1.442695
        %v633 = vpow.pop %v632
        %v634 = vmul.f32 %v602, 1.442695
        %v635 = vpow.pop %v634
        %v636 = vmul.f32 %v607, 1.442695
        %v637 = vpow.pop %v636
        %v638 = vmul.f32 %v307, %v631
        %v639 = vmul.f32 %v308, %v633
        %v640 = vmul.f32 %v309, %v635
        %v641 = vmul.f32 %v310, %v637
        %v642 = vadd.f32 %v638, %v612
        %v643 = vadd.f32 %v639, %v617
        %v644 = vadd.f32 %v640, %v622
        %v645 = vadd.f32 %v641, %v627
        %v646 = vadd.f32 %v592, %v597
        %v647 = vadd.f32 %v646, %v602
        %v648 = vadd.f32 %v647, %v607
        %v649 = vrot.slane %v648, 4
        %v650 = vadd.f32 %v648, %v649
        %v651 = vrot.slane %v650, 2
        %v652 = vadd.f32 %v650, %v651
        %v653 = vrot.slane %v652, 1
        %v654 = vadd.f32 %v652, %v653
        %v655 = vadd.f32 %v654, 0.0
        %s656 = scalar_lea.vmem %s296, 32 [#allocation3]
        %657 = vst [vmem:[%s656] sm:$0xff] %v642
        %658 = vst [vmem:[%s656 + $0x8] sm:$0xff] %v643
        %659 = vst [vmem:[%s656 + $0x10] sm:$0xff] %v644
        %660 = vst [vmem:[%s656 + $0x18] sm:$0xff] %v645
        %s661 = scalar_lea.vmem %s1, 32
        %v662 = vld [vmem:[%s661] sm:$0xff]
        %v663 = vld [vmem:[%s661 + $0x8] sm:$0xff]
        %v664 = vld [vmem:[%s661 + $0x10] sm:$0xff]
        %v665 = vld [vmem:[%s661 + $0x18] sm:$0xff]
        %s666 = scalar_lea.vmem %s2, 32
        %v667 = vld [vmem:[%s666] sm:$0xff]
        %v668 = vld [vmem:[%s666 + $0x8] sm:$0xff]
        %v669 = vld [vmem:[%s666 + $0x10] sm:$0xff]
        %v670 = vld [vmem:[%s666 + $0x18] sm:$0xff]
        %672 = vset.pattern.permute.xlu0 0
        %673 = vperm.xlu0 %672, %v667
        %v674 = vpop.permute.xlu0 %673
        %677 = vset.pattern.permute.xlu0 0
        %678 = vperm.xlu0 %677, %v668
        %v679 = vpop.permute.xlu0 %678
        %682 = vset.pattern.permute.xlu0 0
        %683 = vperm.xlu0 %682, %v669
        %v684 = vpop.permute.xlu0 %683
        %687 = vset.pattern.permute.xlu0 0
        %688 = vperm.xlu0 %687, %v670
        %v689 = vpop.permute.xlu0 %688
        %v692 = vsel %vm343, %v662, 0
        %v695 = vsel %vm343, %v663, 0
        %v698 = vsel %vm343, %v664, 0
        %v701 = vsel %vm343, %v665, 0
        %703 = vmatprep.subr.mxu0 0.0
        %704 = vmatpush1.msra.mxu0 %v642
        %705 = vmatprep.subr.mxu0 0.0
        %706 = vmatpush1.msra.mxu0 %v643
        %707 = vmatprep.subr.mxu0 0.0
        %708 = vmatpush1.msra.mxu0 %v644
        %709 = vmatprep.subr.mxu0 0.0
        %710 = vmatpush1.msra.mxu0 %v645
        %711 = vmatprep.subr.mxu0 0.0
        %712 = vmatpush1.msra.mxu0 0.0
        %713 = vmatprep.subr.mxu0 0.0
        %714 = vmatpush1.msra.mxu0 0.0
        %715 = vmatprep.subr.mxu0 0.0
        %716 = vmatpush1.msra.mxu0 0.0
        %717 = vmatprep.subr.mxu0 0.0
        %718 = vmatpush1.msra.mxu0 0.0
        %719 = vmatprep.subr.mxu0 0.0
        %720 = vmatpush1.msra.mxu0 0.0
        %721 = vmatprep.subr.mxu0 0.0
        %722 = vmatpush1.msra.mxu0 0.0
        %723 = vmatprep.subr.mxu0 0.0
        %724 = vmatpush1.msra.mxu0 0.0
        %725 = vmatprep.subr.mxu0 0.0
        %726 = vmatpush1.msra.mxu0 0.0
        %727 = vmatprep.subr.mxu0 0.0
        %728 = vmatpush1.msra.mxu0 0.0
        %729 = vmatprep.subr.mxu0 0.0
        %730 = vmatpush1.msra.mxu0 0.0
        %731 = vmatprep.subr.mxu0 0.0
        %732 = vmatpush1.msra.mxu0 0.0
        %733 = vmatprep.subr.mxu0 0.0
        %734 = vmatpush1.msra.mxu0 0.0
        %735 = vmatprep.subr.mxu0 0.0
        %736 = vmatpush1.msra.mxu0 0.0
        %737 = vmatprep.subr.mxu0 0.0
        %738 = vmatpush1.msra.mxu0 0.0
        %739 = vmatprep.subr.mxu0 0.0
        %740 = vmatpush1.msra.mxu0 0.0
        %741 = vmatprep.subr.mxu0 0.0
        %742 = vmatpush1.msra.mxu0 0.0
        %743 = vmatprep.subr.mxu0 0.0
        %744 = vmatpush1.msra.mxu0 0.0
        %745 = vmatprep.subr.mxu0 0.0
        %746 = vmatpush1.msra.mxu0 0.0
        %747 = vmatprep.subr.mxu0 0.0
        %748 = vmatpush1.msra.mxu0 0.0
        %749 = vmatprep.subr.mxu0 0.0
        %750 = vmatpush1.msra.mxu0 0.0
        %751 = vmatprep.subr.mxu0 0.0
        %752 = vmatpush1.msra.mxu0 0.0
        %753 = vmatprep.subr.mxu0 0.0
        %754 = vmatpush1.msra.mxu0 0.0
        %755 = vmatprep.subr.mxu0 0.0
        %756 = vmatpush1.msra.mxu0 0.0
        %757 = vmatprep.subr.mxu0 0.0
        %758 = vmatpush1.msra.mxu0 0.0
        %759 = vmatprep.subr.mxu0 0.0
        %760 = vmatpush1.msra.mxu0 0.0
        %761 = vmatprep.subr.mxu0 0.0
        %762 = vmatpush1.msra.mxu0 0.0
        %763 = vmatprep.subr.mxu0 0.0
        %764 = vmatpush1.msra.mxu0 0.0
        %765 = vmatprep.subr.mxu0 0.0
        %766 = vmatpush1.msra.mxu0 0.0
        %767 = vmatprep.mubr.f32.mxu0 0.0
        %768 = vmatmul.mubr.f32.gmra.mrb[0].mxu0 %v692
        %v769 = vpop.f32.mrb[0].mxu0
        %v770 = vadd.f32 %v674, %v769
        %v771 = vpop.f32.mrb[0].mxu0
        %772 = vmatprep.mubr.f32.mxu0 0.0
        %773 = vmatmul.mubr.f32.gmra.mrb[0].mxu0 %v695
        %v774 = vpop.f32.mrb[0].mxu0
        %v775 = vadd.f32 %v679, %v774
        %v776 = vpop.f32.mrb[0].mxu0
        %777 = vmatprep.mubr.f32.mxu0 0.0
        %778 = vmatmul.mubr.f32.gmra.mrb[0].mxu0 %v698
        %v779 = vpop.f32.mrb[0].mxu0
        %v780 = vadd.f32 %v684, %v779
        %v781 = vpop.f32.mrb[0].mxu0
        %782 = vmatprep.mubr.f32.mxu0 0.0
        %783 = vmatmul.mubr.f32.gmra.mrb[0].mxu0 %v701
        %v784 = vpop.f32.mrb[0].mxu0
        %v785 = vadd.f32 %v689, %v784
        %v786 = vpop.f32.mrb[0].mxu0
        %787 = vdwg.mxu0
        %v788 = vtanh.pop %v770
        %v789 = vtanh.pop %v775
        %v790 = vtanh.pop %v780
        %v791 = vtanh.pop %v785
        %s792 = scalar_lea.vmem %s3, 64
        %v793 = vld [vmem:[%s792] sm:$0xff]
        %v794 = vld [vmem:[%s792 + $0x8] sm:$0xff]
        %v795 = vld [vmem:[%s792 + $0x10] sm:$0xff]
        %v796 = vld [vmem:[%s792 + $0x18] sm:$0xff]
        %v797 = vld [vmem:[%s792 + $0x20] sm:$0xff]
        %v798 = vld [vmem:[%s792 + $0x28] sm:$0xff]
        %v799 = vld [vmem:[%s792 + $0x30] sm:$0xff]
        %v800 = vld [vmem:[%s792 + $0x38] sm:$0xff]
        %s801 = scalar_lea.vmem %s4, 64
        %v802 = vld [vmem:[%s801] sm:$0xff]
        %v803 = vld [vmem:[%s801 + $0x8] sm:$0xff]
        %v804 = vld [vmem:[%s801 + $0x10] sm:$0xff]
        %v805 = vld [vmem:[%s801 + $0x18] sm:$0xff]
        %v806 = vld [vmem:[%s801 + $0x20] sm:$0xff]
        %v807 = vld [vmem:[%s801 + $0x28] sm:$0xff]
        %v808 = vld [vmem:[%s801 + $0x30] sm:$0xff]
        %v809 = vld [vmem:[%s801 + $0x38] sm:$0xff]
        %811 = vset.pattern.permute.xlu0 0
        %812 = vperm.xlu0 %811, %v802
        %v813 = vpop.permute.xlu0 %812
        %816 = vset.pattern.permute.xlu0 0
        %817 = vperm.xlu0 %816, %v803
        %v818 = vpop.permute.xlu0 %817
        %821 = vset.pattern.permute.xlu0 0
        %822 = vperm.xlu0 %821, %v804
        %v823 = vpop.permute.xlu0 %822
        %826 = vset.pattern.permute.xlu0 0
        %827 = vperm.xlu0 %826, %v805
        %v828 = vpop.permute.xlu0 %827
        %831 = vset.pattern.permute.xlu0 0
        %832 = vperm.xlu0 %831, %v806
        %v833 = vpop.permute.xlu0 %832
        %836 = vset.pattern.permute.xlu0 0
        %837 = vperm.xlu0 %836, %v807
        %v838 = vpop.permute.xlu0 %837
        %841 = vset.pattern.permute.xlu0 0
        %842 = vperm.xlu0 %841, %v808
        %v843 = vpop.permute.xlu0 %842
        %846 = vset.pattern.permute.xlu0 0
        %847 = vperm.xlu0 %846, %v809
        %v848 = vpop.permute.xlu0 %847
        %v851 = vsel %vm343, %v793, 0
        %v854 = vsel %vm343, %v794, 0
        %v857 = vsel %vm343, %v795, 0
        %v860 = vsel %vm343, %v796, 0
        %v863 = vsel %vm343, %v797, 0
        %v866 = vsel %vm343, %v798, 0
        %v869 = vsel %vm343, %v799, 0
        %v872 = vsel %vm343, %v800, 0
        %874 = vmatprep.subr.mxu0 0.0
        %875 = vmatpush1.msra.mxu0 %v788
        %876 = vmatprep.subr.mxu0 0.0
        %877 = vmatpush1.msra.mxu0 %v789
        %878 = vmatprep.subr.mxu0 0.0
        %879 = vmatpush1.msra.mxu0 %v790
        %880 = vmatprep.subr.mxu0 0.0
        %881 = vmatpush1.msra.mxu0 %v791
        %882 = vmatprep.subr.mxu0 0.0
        %883 = vmatpush1.msra.mxu0 0.0
        %884 = vmatprep.subr.mxu0 0.0
        %885 = vmatpush1.msra.mxu0 0.0
        %886 = vmatprep.subr.mxu0 0.0
        %887 = vmatpush1.msra.mxu0 0.0
        %888 = vmatprep.subr.mxu0 0.0
        %889 = vmatpush1.msra.mxu0 0.0
        %890 = vmatprep.subr.mxu0 0.0
        %891 = vmatpush1.msra.mxu0 0.0
        %892 = vmatprep.subr.mxu0 0.0
        %893 = vmatpush1.msra.mxu0 0.0
        %894 = vmatprep.subr.mxu0 0.0
        %895 = vmatpush1.msra.mxu0 0.0
        %896 = vmatprep.subr.mxu0 0.0
        %897 = vmatpush1.msra.mxu0 0.0
        %898 = vmatprep.subr.mxu0 0.0
        %899 = vmatpush1.msra.mxu0 0.0
        %900 = vmatprep.subr.mxu0 0.0
        %901 = vmatpush1.msra.mxu0 0.0
        %902 = vmatprep.subr.mxu0 0.0
        %903 = vmatpush1.msra.mxu0 0.0
        %904 = vmatprep.subr.mxu0 0.0
        %905 = vmatpush1.msra.mxu0 0.0
        %906 = vmatprep.subr.mxu0 0.0
        %907 = vmatpush1.msra.mxu0 0.0
        %908 = vmatprep.subr.mxu0 0.0
        %909 = vmatpush1.msra.mxu0 0.0
        %910 = vmatprep.subr.mxu0 0.0
        %911 = vmatpush1.msra.mxu0 0.0
        %912 = vmatprep.subr.mxu0 0.0
        %913 = vmatpush1.msra.mxu0 0.0
        %914 = vmatprep.subr.mxu0 0.0
        %915 = vmatpush1.msra.mxu0 0.0
        %916 = vmatprep.subr.mxu0 0.0
        %917 = vmatpush1.msra.mxu0 0.0
        %918 = vmatprep.subr.mxu0 0.0
        %919 = vmatpush1.msra.mxu0 0.0
        %920 = vmatprep.subr.mxu0 0.0
        %921 = vmatpush1.msra.mxu0 0.0
        %922 = vmatprep.subr.mxu0 0.0
        %923 = vmatpush1.msra.mxu0 0.0
        %924 = vmatprep.subr.mxu0 0.0
        %925 = vmatpush1.msra.mxu0 0.0
        %926 = vmatprep.subr.mxu0 0.0
        %927 = vmatpush1.msra.mxu0 0.0
        %928 = vmatprep.subr.mxu0 0.0
        %929 = vmatpush1.msra.mxu0 0.0
        %930 = vmatprep.subr.mxu0 0.0
        %931 = vmatpush1.msra.mxu0 0.0
        %932 = vmatprep.subr.mxu0 0.0
        %933 = vmatpush1.msra.mxu0 0.0
        %934 = vmatprep.subr.mxu0 0.0
        %935 = vmatpush1.msra.mxu0 0.0
        %936 = vmatprep.subr.mxu0 0.0
        %937 = vmatpush1.msra.mxu0 0.0
        %938 = vmatprep.mubr.f32.mxu0 0.0
        %939 = vmatmul.mubr.f32.gmra.mrb[0].mxu0 %v851
        %v940 = vpop.f32.mrb[0].mxu0
        %v941 = vadd.f32 %v813, %v940
        %v942 = vpop.f32.mrb[0].mxu0
        %943 = vmatprep.mubr.f32.mxu0 0.0
        %944 = vmatmul.mubr.f32.gmra.mrb[0].mxu0 %v854
        %v945 = vpop.f32.mrb[0].mxu0
        %v946 = vadd.f32 %v818, %v945
        %v947 = vpop.f32.mrb[0].mxu0
        %948 = vmatprep.mubr.f32.mxu0 0.0
        %949 = vmatmul.mubr.f32.gmra.mrb[0].mxu0 %v857
        %v950 = vpop.f32.mrb[0].mxu0
        %v951 = vadd.f32 %v823, %v950
        %v952 = vpop.f32.mrb[0].mxu0
        %953 = vmatprep.mubr.f32.mxu0 0.0
        %954 = vmatmul.mubr.f32.gmra.mrb[0].mxu0 %v860
        %v955 = vpop.f32.mrb[0].mxu0
        %v956 = vadd.f32 %v828, %v955
        %v957 = vpop.f32.mrb[0].mxu0
        %958 = vmatprep.mubr.f32.mxu0 0.0
        %959 = vmatmul.mubr.f32.gmra.mrb[0].mxu0 %v863
        %v960 = vpop.f32.mrb[0].mxu0
        %v961 = vadd.f32 %v833, %v960
        %v962 = vpop.f32.mrb[0].mxu0
        %963 = vmatprep.mubr.f32.mxu0 0.0
        %964 = vmatmul.mubr.f32.gmra.mrb[0].mxu0 %v866
        %v965 = vpop.f32.mrb[0].mxu0
        %v966 = vadd.f32 %v838, %v965
        %v967 = vpop.f32.mrb[0].mxu0
        %968 = vmatprep.mubr.f32.mxu0 0.0
        %969 = vmatmul.mubr.f32.gmra.mrb[0].mxu0 %v869
        %v970 = vpop.f32.mrb[0].mxu0
        %v971 = vadd.f32 %v843, %v970
        %v972 = vpop.f32.mrb[0].mxu0
        %973 = vmatprep.mubr.f32.mxu0 0.0
        %974 = vmatmul.mubr.f32.gmra.mrb[0].mxu0 %v872
        %v975 = vpop.f32.mrb[0].mxu0
        %v976 = vadd.f32 %v848, %v975
        %v977 = vpop.f32.mrb[0].mxu0
        %978 = vdwg.mxu0
        %v979 = vmul.f32 %v941, 1.442695
        %v980 = vpow.pop %v979
        %v981 = vmul.f32 %v946, 1.442695
        %v982 = vpow.pop %v981
        %v983 = vmul.f32 %v951, 1.442695
        %v984 = vpow.pop %v983
        %v985 = vmul.f32 %v956, 1.442695
        %v986 = vpow.pop %v985
        %v987 = vmul.f32 %v642, %v980
        %v988 = vmul.f32 %v643, %v982
        %v989 = vmul.f32 %v644, %v984
        %v990 = vmul.f32 %v645, %v986
        %v991 = vadd.f32 %v987, %v961
        %v992 = vadd.f32 %v988, %v966
        %v993 = vadd.f32 %v989, %v971
        %v994 = vadd.f32 %v990, %v976
        %v995 = vadd.f32 %v941, %v946
        %v996 = vadd.f32 %v995, %v951
        %v997 = vadd.f32 %v996, %v956
        %v998 = vrot.slane %v997, 4
        %v999 = vadd.f32 %v997, %v998
        %v1000 = vrot.slane %v999, 2
        %v1001 = vadd.f32 %v999, %v1000
        %v1002 = vrot.slane %v1001, 1
        %v1003 = vadd.f32 %v1001, %v1002
        %v1004 = vadd.f32 %v655, %v1003
        %s1005 = scalar_lea.vmem %s296, 64 [#allocation3]
        %1006 = vst [vmem:[%s1005] sm:$0xff] %v991
        %1007 = vst [vmem:[%s1005 + $0x8] sm:$0xff] %v992
        %1008 = vst [vmem:[%s1005 + $0x10] sm:$0xff] %v993
        %1009 = vst [vmem:[%s1005 + $0x18] sm:$0xff] %v994
        %s1010 = scalar_lea.vmem %s1, 64
        %v1011 = vld [vmem:[%s1010] sm:$0xff]
        %v1012 = vld [vmem:[%s1010 + $0x8] sm:$0xff]
        %v1013 = vld [vmem:[%s1010 + $0x10] sm:$0xff]
        %v1014 = vld [vmem:[%s1010 + $0x18] sm:$0xff]
        %s1015 = scalar_lea.vmem %s2, 64
        %v1016 = vld [vmem:[%s1015] sm:$0xff]
        %v1017 = vld [vmem:[%s1015 + $0x8] sm:$0xff]
        %v1018 = vld [vmem:[%s1015 + $0x10] sm:$0xff]
        %v1019 = vld [vmem:[%s1015 + $0x18] sm:$0xff]
        %1021 = vset.pattern.permute.xlu0 0
        %1022 = vperm.xlu0 %1021, %v1016
        %v1023 = vpop.permute.xlu0 %1022
        %1026 = vset.pattern.permute.xlu0 0
        %1027 = vperm.xlu0 %1026, %v1017
        %v1028 = vpop.permute.xlu0 %1027
        %1031 = vset.pattern.permute.xlu0 0
        %1032 = vperm.xlu0 %1031, %v1018
        %v1033 = vpop.permute.xlu0 %1032
        %1036 = vset.pattern.permute.xlu0 0
        %1037 = vperm.xlu0 %1036, %v1019
        %v1038 = vpop.permute.xlu0 %1037
        %v1041 = vsel %vm343, %v1011, 0
        %v1044 = vsel %vm343, %v1012, 0
        %v1047 = vsel %vm343, %v1013, 0
        %v1050 = vsel %vm343, %v1014, 0
        %1052 = vmatprep.subr.mxu0 0.0
        %1053 = vmatpush1.msra.mxu0 %v991
        %1054 = vmatprep.subr.mxu0 0.0
        %1055 = vmatpush1.msra.mxu0 %v992
        %1056 = vmatprep.subr.mxu0 0.0
        %1057 = vmatpush1.msra.mxu0 %v993
        %1058 = vmatprep.subr.mxu0 0.0
        %1059 = vmatpush1.msra.mxu0 %v994
        %1060 = vmatprep.subr.mxu0 0.0
        %1061 = vmatpush1.msra.mxu0 0.0
        %1062 = vmatprep.subr.mxu0 0.0
        %1063 = vmatpush1.msra.mxu0 0.0
        %1064 = vmatprep.subr.mxu0 0.0
        %1065 = vmatpush1.msra.mxu0 0.0
        %1066 = vmatprep.subr.mxu0 0.0
        %1067 = vmatpush1.msra.mxu0 0.0
        %1068 = vmatprep.subr.mxu0 0.0
        %1069 = vmatpush1.msra.mxu0 0.0
        %1070 = vmatprep.subr.mxu0 0.0
        %1071 = vmatpush1.msra.mxu0 0.0
        %1072 = vmatprep.subr.mxu0 0.0
        %1073 = vmatpush1.msra.mxu0 0.0
        %1074 = vmatprep.subr.mxu0 0.0
        %1075 = vmatpush1.msra.mxu0 0.0
        %1076 = vmatprep.subr.mxu0 0.0
        %1077 = vmatpush1.msra.mxu0 0.0
        %1078 = vmatprep.subr.mxu0 0.0
        %1079 = vmatpush1.msra.mxu0 0.0
        %1080 = vmatprep.subr.mxu0 0.0
        %1081 = vmatpush1.msra.mxu0 0.0
        %1082 = vmatprep.subr.mxu0 0.0
        %1083 = vmatpush1.msra.mxu0 0.0
        %1084 = vmatprep.subr.mxu0 0.0
        %1085 = vmatpush1.msra.mxu0 0.0
        %1086 = vmatprep.subr.mxu0 0.0
        %1087 = vmatpush1.msra.mxu0 0.0
        %1088 = vmatprep.subr.mxu0 0.0
        %1089 = vmatpush1.msra.mxu0 0.0
        %1090 = vmatprep.subr.mxu0 0.0
        %1091 = vmatpush1.msra.mxu0 0.0
        %1092 = vmatprep.subr.mxu0 0.0
        %1093 = vmatpush1.msra.mxu0 0.0
        %1094 = vmatprep.subr.mxu0 0.0
        %1095 = vmatpush1.msra.mxu0 0.0
        %1096 = vmatprep.subr.mxu0 0.0
        %1097 = vmatpush1.msra.mxu0 0.0
        %1098 = vmatprep.subr.mxu0 0.0
        %1099 = vmatpush1.msra.mxu0 0.0
        %1100 = vmatprep.subr.mxu0 0.0
        %1101 = vmatpush1.msra.mxu0 0.0
        %1102 = vmatprep.subr.mxu0 0.0
        %1103 = vmatpush1.msra.mxu0 0.0
        %1104 = vmatprep.subr.mxu0 0.0
        %1105 = vmatpush1.msra.mxu0 0.0
        %1106 = vmatprep.subr.mxu0 0.0
        %1107 = vmatpush1.msra.mxu0 0.0
        %1108 = vmatprep.subr.mxu0 0.0
        %1109 = vmatpush1.msra.mxu0 0.0
        %1110 = vmatprep.subr.mxu0 0.0
        %1111 = vmatpush1.msra.mxu0 0.0
        %1112 = vmatprep.subr.mxu0 0.0
        %1113 = vmatpush1.msra.mxu0 0.0
        %1114 = vmatprep.subr.mxu0 0.0
        %1115 = vmatpush1.msra.mxu0 0.0
        %1116 = vmatprep.mubr.f32.mxu0 0.0
        %1117 = vmatmul.mubr.f32.gmra.mrb[0].mxu0 %v1041
        %v1118 = vpop.f32.mrb[0].mxu0
        %v1119 = vadd.f32 %v1023, %v1118
        %v1120 = vpop.f32.mrb[0].mxu0
        %1121 = vmatprep.mubr.f32.mxu0 0.0
        %1122 = vmatmul.mubr.f32.gmra.mrb[0].mxu0 %v1044
        %v1123 = vpop.f32.mrb[0].mxu0
        %v1124 = vadd.f32 %v1028, %v1123
        %v1125 = vpop.f32.mrb[0].mxu0
        %1126 = vmatprep.mubr.f32.mxu0 0.0
        %1127 = vmatmul.mubr.f32.gmra.mrb[0].mxu0 %v1047
        %v1128 = vpop.f32.mrb[0].mxu0
        %v1129 = vadd.f32 %v1033, %v1128
        %v1130 = vpop.f32.mrb[0].mxu0
        %1131 = vmatprep.mubr.f32.mxu0 0.0
        %1132 = vmatmul.mubr.f32.gmra.mrb[0].mxu0 %v1050
        %v1133 = vpop.f32.mrb[0].mxu0
        %v1134 = vadd.f32 %v1038, %v1133
        %v1135 = vpop.f32.mrb[0].mxu0
        %1136 = vdwg.mxu0
        %v1137 = vtanh.pop %v1119
        %v1138 = vtanh.pop %v1124
        %v1139 = vtanh.pop %v1129
        %v1140 = vtanh.pop %v1134
        %s1141 = scalar_lea.vmem %s3, 128
        %v1142 = vld [vmem:[%s1141] sm:$0xff]
        %v1143 = vld [vmem:[%s1141 + $0x8] sm:$0xff]
        %v1144 = vld [vmem:[%s1141 + $0x10] sm:$0xff]
        %v1145 = vld [vmem:[%s1141 + $0x18] sm:$0xff]
        %v1146 = vld [vmem:[%s1141 + $0x20] sm:$0xff]
        %v1147 = vld [vmem:[%s1141 + $0x28] sm:$0xff]
        %v1148 = vld [vmem:[%s1141 + $0x30] sm:$0xff]
        %v1149 = vld [vmem:[%s1141 + $0x38] sm:$0xff]
        %s1150 = scalar_lea.vmem %s4, 128
        %v1151 = vld [vmem:[%s1150] sm:$0xff]
        %v1152 = vld [vmem:[%s1150 + $0x8] sm:$0xff]
        %v1153 = vld [vmem:[%s1150 + $0x10] sm:$0xff]
        %v1154 = vld [vmem:[%s1150 + $0x18] sm:$0xff]
        %v1155 = vld [vmem:[%s1150 + $0x20] sm:$0xff]
        %v1156 = vld [vmem:[%s1150 + $0x28] sm:$0xff]
        %v1157 = vld [vmem:[%s1150 + $0x30] sm:$0xff]
        %v1158 = vld [vmem:[%s1150 + $0x38] sm:$0xff]
        %1160 = vset.pattern.permute.xlu0 0
        %1161 = vperm.xlu0 %1160, %v1151
        %v1162 = vpop.permute.xlu0 %1161
        %1165 = vset.pattern.permute.xlu0 0
        %1166 = vperm.xlu0 %1165, %v1152
        %v1167 = vpop.permute.xlu0 %1166
        %1170 = vset.pattern.permute.xlu0 0
        %1171 = vperm.xlu0 %1170, %v1153
        %v1172 = vpop.permute.xlu0 %1171
        %1175 = vset.pattern.permute.xlu0 0
        %1176 = vperm.xlu0 %1175, %v1154
        %v1177 = vpop.permute.xlu0 %1176
        %1180 = vset.pattern.permute.xlu0 0
        %1181 = vperm.xlu0 %1180, %v1155
        %v1182 = vpop.permute.xlu0 %1181
        %1185 = vset.pattern.permute.xlu0 0
        %1186 = vperm.xlu0 %1185, %v1156
        %v1187 = vpop.permute.xlu0 %1186
        %1190 = vset.pattern.permute.xlu0 0
        %1191 = vperm.xlu0 %1190, %v1157
        %v1192 = vpop.permute.xlu0 %1191
        %1195 = vset.pattern.permute.xlu0 0
        %1196 = vperm.xlu0 %1195, %v1158
        %v1197 = vpop.permute.xlu0 %1196
        %v1200 = vsel %vm343, %v1142, 0
        %v1203 = vsel %vm343, %v1143, 0
        %v1206 = vsel %vm343, %v1144, 0
        %v1209 = vsel %vm343, %v1145, 0
        %v1212 = vsel %vm343, %v1146, 0
        %v1215 = vsel %vm343, %v1147, 0
        %v1218 = vsel %vm343, %v1148, 0
        %v1221 = vsel %vm343, %v1149, 0
        %1223 = vmatprep.subr.mxu0 0.0
        %1224 = vmatpush1.msra.mxu0 %v1137
        %1225 = vmatprep.subr.mxu0 0.0
        %1226 = vmatpush1.msra.mxu0 %v1138
        %1227 = vmatprep.subr.mxu0 0.0
        %1228 = vmatpush1.msra.mxu0 %v1139
        %1229 = vmatprep.subr.mxu0 0.0
        %1230 = vmatpush1.msra.mxu0 %v1140
        %1231 = vmatprep.subr.mxu0 0.0
        %1232 = vmatpush1.msra.mxu0 0.0
        %1233 = vmatprep.subr.mxu0 0.0
        %1234 = vmatpush1.msra.mxu0 0.0
        %1235 = vmatprep.subr.mxu0 0.0
        %1236 = vmatpush1.msra.mxu0 0.0
        %1237 = vmatprep.subr.mxu0 0.0
        %1238 = vmatpush1.msra.mxu0 0.0
        %1239 = vmatprep.subr.mxu0 0.0
        %1240 = vmatpush1.msra.mxu0 0.0
        %1241 = vmatprep.subr.mxu0 0.0
        %1242 = vmatpush1.msra.mxu0 0.0
        %1243 = vmatprep.subr.mxu0 0.0
        %1244 = vmatpush1.msra.mxu0 0.0
        %1245 = vmatprep.subr.mxu0 0.0
        %1246 = vmatpush1.msra.mxu0 0.0
        %1247 = vmatprep.subr.mxu0 0.0
        %1248 = vmatpush1.msra.mxu0 0.0
        %1249 = vmatprep.subr.mxu0 0.0
        %1250 = vmatpush1.msra.mxu0 0.0
        %1251 = vmatprep.subr.mxu0 0.0
        %1252 = vmatpush1.msra.mxu0 0.0
        %1253 = vmatprep.subr.mxu0 0.0
        %1254 = vmatpush1.msra.mxu0 0.0
        %1255 = vmatprep.subr.mxu0 0.0
        %1256 = vmatpush1.msra.mxu0 0.0
        %1257 = vmatprep.subr.mxu0 0.0
        %1258 = vmatpush1.msra.mxu0 0.0
        %1259 = vmatprep.subr.mxu0 0.0
        %1260 = vmatpush1.msra.mxu0 0.0
        %1261 = vmatprep.subr.mxu0 0.0
        %1262 = vmatpush1.msra.mxu0 0.0
        %1263 = vmatprep.subr.mxu0 0.0
        %1264 = vmatpush1.msra.mxu0 0.0
        %1265 = vmatprep.subr.mxu0 0.0
        %1266 = vmatpush1.msra.mxu0 0.0
        %1267 = vmatprep.subr.mxu0 0.0
        %1268 = vmatpush1.msra.mxu0 0.0
        %1269 = vmatprep.subr.mxu0 0.0
        %1270 = vmatpush1.msra.mxu0 0.0
        %1271 = vmatprep.subr.mxu0 0.0
        %1272 = vmatpush1.msra.mxu0 0.0
        %1273 = vmatprep.subr.mxu0 0.0
        %1274 = vmatpush1.msra.mxu0 0.0
        %1275 = vmatprep.subr.mxu0 0.0
        %1276 = vmatpush1.msra.mxu0 0.0
        %1277 = vmatprep.subr.mxu0 0.0
        %1278 = vmatpush1.msra.mxu0 0.0
        %1279 = vmatprep.subr.mxu0 0.0
        %1280 = vmatpush1.msra.mxu0 0.0
        %1281 = vmatprep.subr.mxu0 0.0
        %1282 = vmatpush1.msra.mxu0 0.0
        %1283 = vmatprep.subr.mxu0 0.0
        %1284 = vmatpush1.msra.mxu0 0.0
        %1285 = vmatprep.subr.mxu0 0.0
        %1286 = vmatpush1.msra.mxu0 0.0
        %1287 = vmatprep.mubr.f32.mxu0 0.0
        %1288 = vmatmul.mubr.f32.gmra.mrb[0].mxu0 %v1200
        %v1289 = vpop.f32.mrb[0].mxu0
        %v1290 = vadd.f32 %v1162, %v1289
        %v1291 = vpop.f32.mrb[0].mxu0
        %1292 = vmatprep.mubr.f32.mxu0 0.0
        %1293 = vmatmul.mubr.f32.gmra.mrb[0].mxu0 %v1203
        %v1294 = vpop.f32.mrb[0].mxu0
        %v1295 = vadd.f32 %v1167, %v1294
        %v1296 = vpop.f32.mrb[0].mxu0
        %1297 = vmatprep.mubr.f32.mxu0 0.0
        %1298 = vmatmul.mubr.f32.gmra.mrb[0].mxu0 %v1206
        %v1299 = vpop.f32.mrb[0].mxu0
        %v1300 = vadd.f32 %v1172, %v1299
        %v1301 = vpop.f32.mrb[0].mxu0
        %1302 = vmatprep.mubr.f32.mxu0 0.0
        %1303 = vmatmul.mubr.f32.gmra.mrb[0].mxu0 %v1209
        %v1304 = vpop.f32.mrb[0].mxu0
        %v1305 = vadd.f32 %v1177, %v1304
        %v1306 = vpop.f32.mrb[0].mxu0
        %1307 = vmatprep.mubr.f32.mxu0 0.0
        %1308 = vmatmul.mubr.f32.gmra.mrb[0].mxu0 %v1212
        %v1309 = vpop.f32.mrb[0].mxu0
        %v1310 = vadd.f32 %v1182, %v1309
        %v1311 = vpop.f32.mrb[0].mxu0
        %1312 = vmatprep.mubr.f32.mxu0 0.0
        %1313 = vmatmul.mubr.f32.gmra.mrb[0].mxu0 %v1215
        %v1314 = vpop.f32.mrb[0].mxu0
        %v1315 = vadd.f32 %v1187, %v1314
        %v1316 = vpop.f32.mrb[0].mxu0
        %1317 = vmatprep.mubr.f32.mxu0 0.0
        %1318 = vmatmul.mubr.f32.gmra.mrb[0].mxu0 %v1218
        %v1319 = vpop.f32.mrb[0].mxu0
        %v1320 = vadd.f32 %v1192, %v1319
        %v1321 = vpop.f32.mrb[0].mxu0
        %1322 = vmatprep.mubr.f32.mxu0 0.0
        %1323 = vmatmul.mubr.f32.gmra.mrb[0].mxu0 %v1221
        %v1324 = vpop.f32.mrb[0].mxu0
        %v1325 = vadd.f32 %v1197, %v1324
        %v1326 = vpop.f32.mrb[0].mxu0
        %1327 = vdwg.mxu0
        %v1328 = vmul.f32 %v1290, 1.442695
        %v1329 = vpow.pop %v1328
        %v1330 = vmul.f32 %v1295, 1.442695
        %v1331 = vpow.pop %v1330
        %v1332 = vmul.f32 %v1300, 1.442695
        %v1333 = vpow.pop %v1332
        %v1334 = vmul.f32 %v1305, 1.442695
        %v1335 = vpow.pop %v1334
        %v1336 = vmul.f32 %v991, %v1329
        %v1337 = vmul.f32 %v992, %v1331
        %v1338 = vmul.f32 %v993, %v1333
        %v1339 = vmul.f32 %v994, %v1335
        %v1340 = vadd.f32 %v1336, %v1310
        %v1341 = vadd.f32 %v1337, %v1315
        %v1342 = vadd.f32 %v1338, %v1320
        %v1343 = vadd.f32 %v1339, %v1325
        %v1344 = vadd.f32 %v1290, %v1295
        %v1345 = vadd.f32 %v1344, %v1300
        %v1346 = vadd.f32 %v1345, %v1305
        %v1347 = vrot.slane %v1346, 4
        %v1348 = vadd.f32 %v1346, %v1347
        %v1349 = vrot.slane %v1348, 2
        %v1350 = vadd.f32 %v1348, %v1349
        %v1351 = vrot.slane %v1350, 1
        %v1352 = vadd.f32 %v1350, %v1351
        %v1353 = vadd.f32 %v1004, %v1352
        %s1354 = scalar_lea.vmem %s296, 96 [#allocation3]
        %1355 = vst [vmem:[%s1354] sm:$0xff] %v1340
        %1356 = vst [vmem:[%s1354 + $0x8] sm:$0xff] %v1341
        %1357 = vst [vmem:[%s1354 + $0x10] sm:$0xff] %v1342
        %1358 = vst [vmem:[%s1354 + $0x18] sm:$0xff] %v1343
        %s1359 = scalar_lea.vmem %s1, 96
        %v1360 = vld [vmem:[%s1359] sm:$0xff]
        %v1361 = vld [vmem:[%s1359 + $0x8] sm:$0xff]
        %v1362 = vld [vmem:[%s1359 + $0x10] sm:$0xff]
        %v1363 = vld [vmem:[%s1359 + $0x18] sm:$0xff]
        %s1364 = scalar_lea.vmem %s2, 96
        %v1365 = vld [vmem:[%s1364] sm:$0xff]
        %v1366 = vld [vmem:[%s1364 + $0x8] sm:$0xff]
        %v1367 = vld [vmem:[%s1364 + $0x10] sm:$0xff]
        %v1368 = vld [vmem:[%s1364 + $0x18] sm:$0xff]
        %1370 = vset.pattern.permute.xlu0 0
        %1371 = vperm.xlu0 %1370, %v1365
        %v1372 = vpop.permute.xlu0 %1371
        %1375 = vset.pattern.permute.xlu0 0
        %1376 = vperm.xlu0 %1375, %v1366
        %v1377 = vpop.permute.xlu0 %1376
        %1380 = vset.pattern.permute.xlu0 0
        %1381 = vperm.xlu0 %1380, %v1367
        %v1382 = vpop.permute.xlu0 %1381
        %1385 = vset.pattern.permute.xlu0 0
        %1386 = vperm.xlu0 %1385, %v1368
        %v1387 = vpop.permute.xlu0 %1386
        %v1390 = vsel %vm343, %v1360, 0
        %v1393 = vsel %vm343, %v1361, 0
        %v1396 = vsel %vm343, %v1362, 0
        %v1399 = vsel %vm343, %v1363, 0
        %1401 = vmatprep.subr.mxu0 0.0
        %1402 = vmatpush1.msra.mxu0 %v1340
        %1403 = vmatprep.subr.mxu0 0.0
        %1404 = vmatpush1.msra.mxu0 %v1341
        %1405 = vmatprep.subr.mxu0 0.0
        %1406 = vmatpush1.msra.mxu0 %v1342
        %1407 = vmatprep.subr.mxu0 0.0
        %1408 = vmatpush1.msra.mxu0 %v1343
        %1409 = vmatprep.subr.mxu0 0.0
        %1410 = vmatpush1.msra.mxu0 0.0
        %1411 = vmatprep.subr.mxu0 0.0
        %1412 = vmatpush1.msra.mxu0 0.0
        %1413 = vmatprep.subr.mxu0 0.0
        %1414 = vmatpush1.msra.mxu0 0.0
        %1415 = vmatprep.subr.mxu0 0.0
        %1416 = vmatpush1.msra.mxu0 0.0
        %1417 = vmatprep.subr.mxu0 0.0
        %1418 = vmatpush1.msra.mxu0 0.0
        %1419 = vmatprep.subr.mxu0 0.0
        %1420 = vmatpush1.msra.mxu0 0.0
        %1421 = vmatprep.subr.mxu0 0.0
        %1422 = vmatpush1.msra.mxu0 0.0
        %1423 = vmatprep.subr.mxu0 0.0
        %1424 = vmatpush1.msra.mxu0 0.0
        %1425 = vmatprep.subr.mxu0 0.0
        %1426 = vmatpush1.msra.mxu0 0.0
        %1427 = vmatprep.subr.mxu0 0.0
        %1428 = vmatpush1.msra.mxu0 0.0
        %1429 = vmatprep.subr.mxu0 0.0
        %1430 = vmatpush1.msra.mxu0 0.0
        %1431 = vmatprep.subr.mxu0 0.0
        %1432 = vmatpush1.msra.mxu0 0.0
        %1433 = vmatprep.subr.mxu0 0.0
        %1434 = vmatpush1.msra.mxu0 0.0
        %1435 = vmatprep.subr.mxu0 0.0
        %1436 = vmatpush1.msra.mxu0 0.0
        %1437 = vmatprep.subr.mxu0 0.0
        %1438 = vmatpush1.msra.mxu0 0.0
        %1439 = vmatprep.subr.mxu0 0.0
        %1440 = vmatpush1.msra.mxu0 0.0
        %1441 = vmatprep.subr.mxu0 0.0
        %1442 = vmatpush1.msra.mxu0 0.0
        %1443 = vmatprep.subr.mxu0 0.0
        %1444 = vmatpush1.msra.mxu0 0.0
        %1445 = vmatprep.subr.mxu0 0.0
        %1446 = vmatpush1.msra.mxu0 0.0
        %1447 = vmatprep.subr.mxu0 0.0
        %1448 = vmatpush1.msra.mxu0 0.0
        %1449 = vmatprep.subr.mxu0 0.0
        %1450 = vmatpush1.msra.mxu0 0.0
        %1451 = vmatprep.subr.mxu0 0.0
        %1452 = vmatpush1.msra.mxu0 0.0
        %1453 = vmatprep.subr.mxu0 0.0
        %1454 = vmatpush1.msra.mxu0 0.0
        %1455 = vmatprep.subr.mxu0 0.0
        %1456 = vmatpush1.msra.mxu0 0.0
        %1457 = vmatprep.subr.mxu0 0.0
        %1458 = vmatpush1.msra.mxu0 0.0
        %1459 = vmatprep.subr.mxu0 0.0
        %1460 = vmatpush1.msra.mxu0 0.0
        %1461 = vmatprep.subr.mxu0 0.0
        %1462 = vmatpush1.msra.mxu0 0.0
        %1463 = vmatprep.subr.mxu0 0.0
        %1464 = vmatpush1.msra.mxu0 0.0
        %1465 = vmatprep.mubr.f32.mxu0 0.0
        %1466 = vmatmul.mubr.f32.gmra.mrb[0].mxu0 %v1390
        %v1467 = vpop.f32.mrb[0].mxu0
        %v1468 = vadd.f32 %v1372, %v1467
        %v1469 = vpop.f32.mrb[0].mxu0
        %1470 = vmatprep.mubr.f32.mxu0 0.0
        %1471 = vmatmul.mubr.f32.gmra.mrb[0].mxu0 %v1393
        %v1472 = vpop.f32.mrb[0].mxu0
        %v1473 = vadd.f32 %v1377, %v1472
        %v1474 = vpop.f32.mrb[0].mxu0
        %1475 = vmatprep.mubr.f32.mxu0 0.0
        %1476 = vmatmul.mubr.f32.gmra.mrb[0].mxu0 %v1396
        %v1477 = vpop.f32.mrb[0].mxu0
        %v1478 = vadd.f32 %v1382, %v1477
        %v1479 = vpop.f32.mrb[0].mxu0
        %1480 = vmatprep.mubr.f32.mxu0 0.0
        %1481 = vmatmul.mubr.f32.gmra.mrb[0].mxu0 %v1399
        %v1482 = vpop.f32.mrb[0].mxu0
        %v1483 = vadd.f32 %v1387, %v1482
        %v1484 = vpop.f32.mrb[0].mxu0
        %1485 = vdwg.mxu0
        %v1486 = vtanh.pop %v1468
        %v1487 = vtanh.pop %v1473
        %v1488 = vtanh.pop %v1478
        %v1489 = vtanh.pop %v1483
        %s1490 = scalar_lea.vmem %s3, 192
        %v1491 = vld [vmem:[%s1490] sm:$0xff]
        %v1492 = vld [vmem:[%s1490 + $0x8] sm:$0xff]
        %v1493 = vld [vmem:[%s1490 + $0x10] sm:$0xff]
        %v1494 = vld [vmem:[%s1490 + $0x18] sm:$0xff]
        %v1495 = vld [vmem:[%s1490 + $0x20] sm:$0xff]
        %v1496 = vld [vmem:[%s1490 + $0x28] sm:$0xff]
        %v1497 = vld [vmem:[%s1490 + $0x30] sm:$0xff]
        %v1498 = vld [vmem:[%s1490 + $0x38] sm:$0xff]
        %s1499 = scalar_lea.vmem %s4, 192
        %v1500 = vld [vmem:[%s1499] sm:$0xff]
        %v1501 = vld [vmem:[%s1499 + $0x8] sm:$0xff]
        %v1502 = vld [vmem:[%s1499 + $0x10] sm:$0xff]
        %v1503 = vld [vmem:[%s1499 + $0x18] sm:$0xff]
        %v1504 = vld [vmem:[%s1499 + $0x20] sm:$0xff]
        %v1505 = vld [vmem:[%s1499 + $0x28] sm:$0xff]
        %v1506 = vld [vmem:[%s1499 + $0x30] sm:$0xff]
        %v1507 = vld [vmem:[%s1499 + $0x38] sm:$0xff]
        %1509 = vset.pattern.permute.xlu0 0
        %1510 = vperm.xlu0 %1509, %v1500
        %v1511 = vpop.permute.xlu0 %1510
        %1514 = vset.pattern.permute.xlu0 0
        %1515 = vperm.xlu0 %1514, %v1501
        %v1516 = vpop.permute.xlu0 %1515
        %1519 = vset.pattern.permute.xlu0 0
        %1520 = vperm.xlu0 %1519, %v1502
        %v1521 = vpop.permute.xlu0 %1520
        %1524 = vset.pattern.permute.xlu0 0
        %1525 = vperm.xlu0 %1524, %v1503
        %v1526 = vpop.permute.xlu0 %1525
        %1529 = vset.pattern.permute.xlu0 0
        %1530 = vperm.xlu0 %1529, %v1504
        %v1531 = vpop.permute.xlu0 %1530
        %1534 = vset.pattern.permute.xlu0 0
        %1535 = vperm.xlu0 %1534, %v1505
        %v1536 = vpop.permute.xlu0 %1535
        %1539 = vset.pattern.permute.xlu0 0
        %1540 = vperm.xlu0 %1539, %v1506
        %v1541 = vpop.permute.xlu0 %1540
        %1544 = vset.pattern.permute.xlu0 0
        %1545 = vperm.xlu0 %1544, %v1507
        %v1546 = vpop.permute.xlu0 %1545
        %v1549 = vsel %vm343, %v1491, 0
        %v1552 = vsel %vm343, %v1492, 0
        %v1555 = vsel %vm343, %v1493, 0
        %v1558 = vsel %vm343, %v1494, 0
        %v1561 = vsel %vm343, %v1495, 0
        %v1564 = vsel %vm343, %v1496, 0
        %v1567 = vsel %vm343, %v1497, 0
        %v1570 = vsel %vm343, %v1498, 0
        %1572 = vmatprep.subr.mxu0 0.0
        %1573 = vmatpush1.msra.mxu0 %v1486
        %1574 = vmatprep.subr.mxu0 0.0
        %1575 = vmatpush1.msra.mxu0 %v1487
        %1576 = vmatprep.subr.mxu0 0.0
        %1577 = vmatpush1.msra.mxu0 %v1488
        %1578 = vmatprep.subr.mxu0 0.0
        %1579 = vmatpush1.msra.mxu0 %v1489
        %1580 = vmatprep.subr.mxu0 0.0
        %1581 = vmatpush1.msra.mxu0 0.0
        %1582 = vmatprep.subr.mxu0 0.0
        %1583 = vmatpush1.msra.mxu0 0.0
        %1584 = vmatprep.subr.mxu0 0.0
        %1585 = vmatpush1.msra.mxu0 0.0
        %1586 = vmatprep.subr.mxu0 0.0
        %1587 = vmatpush1.msra.mxu0 0.0
        %1588 = vmatprep.subr.mxu0 0.0
        %1589 = vmatpush1.msra.mxu0 0.0
        %1590 = vmatprep.subr.mxu0 0.0
        %1591 = vmatpush1.msra.mxu0 0.0
        %1592 = vmatprep.subr.mxu0 0.0
        %1593 = vmatpush1.msra.mxu0 0.0
        %1594 = vmatprep.subr.mxu0 0.0
        %1595 = vmatpush1.msra.mxu0 0.0
        %1596 = vmatprep.subr.mxu0 0.0
        %1597 = vmatpush1.msra.mxu0 0.0
        %1598 = vmatprep.subr.mxu0 0.0
        %1599 = vmatpush1.msra.mxu0 0.0
        %1600 = vmatprep.subr.mxu0 0.0
        %1601 = vmatpush1.msra.mxu0 0.0
        %1602 = vmatprep.subr.mxu0 0.0
        %1603 = vmatpush1.msra.mxu0 0.0
        %1604 = vmatprep.subr.mxu0 0.0
        %1605 = vmatpush1.msra.mxu0 0.0
        %1606 = vmatprep.subr.mxu0 0.0
        %1607 = vmatpush1.msra.mxu0 0.0
        %1608 = vmatprep.subr.mxu0 0.0
        %1609 = vmatpush1.msra.mxu0 0.0
        %1610 = vmatprep.subr.mxu0 0.0
        %1611 = vmatpush1.msra.mxu0 0.0
        %1612 = vmatprep.subr.mxu0 0.0
        %1613 = vmatpush1.msra.mxu0 0.0
        %1614 = vmatprep.subr.mxu0 0.0
        %1615 = vmatpush1.msra.mxu0 0.0
        %1616 = vmatprep.subr.mxu0 0.0
        %1617 = vmatpush1.msra.mxu0 0.0
        %1618 = vmatprep.subr.mxu0 0.0
        %1619 = vmatpush1.msra.mxu0 0.0
        %1620 = vmatprep.subr.mxu0 0.0
        %1621 = vmatpush1.msra.mxu0 0.0
        %1622 = vmatprep.subr.mxu0 0.0
        %1623 = vmatpush1.msra.mxu0 0.0
        %1624 = vmatprep.subr.mxu0 0.0
        %1625 = vmatpush1.msra.mxu0 0.0
        %1626 = vmatprep.subr.mxu0 0.0
        %1627 = vmatpush1.msra.mxu0 0.0
        %1628 = vmatprep.subr.mxu0 0.0
        %1629 = vmatpush1.msra.mxu0 0.0
        %1630 = vmatprep.subr.mxu0 0.0
        %1631 = vmatpush1.msra.mxu0 0.0
        %1632 = vmatprep.subr.mxu0 0.0
        %1633 = vmatpush1.msra.mxu0 0.0
        %1634 = vmatprep.subr.mxu0 0.0
        %1635 = vmatpush1.msra.mxu0 0.0
        %1636 = vmatprep.mubr.f32.mxu0 0.0
        %1637 = vmatmul.mubr.f32.gmra.mrb[0].mxu0 %v1549
        %v1638 = vpop.f32.mrb[0].mxu0
        %v1639 = vadd.f32 %v1511, %v1638
        %v1640 = vpop.f32.mrb[0].mxu0
        %1641 = vmatprep.mubr.f32.mxu0 0.0
        %1642 = vmatmul.mubr.f32.gmra.mrb[0].mxu0 %v1552
        %v1643 = vpop.f32.mrb[0].mxu0
        %v1644 = vadd.f32 %v1516, %v1643
        %v1645 = vpop.f32.mrb[0].mxu0
        %1646 = vmatprep.mubr.f32.mxu0 0.0
        %1647 = vmatmul.mubr.f32.gmra.mrb[0].mxu0 %v1555
        %v1648 = vpop.f32.mrb[0].mxu0
        %v1649 = vadd.f32 %v1521, %v1648
        %v1650 = vpop.f32.mrb[0].mxu0
        %1651 = vmatprep.mubr.f32.mxu0 0.0
        %1652 = vmatmul.mubr.f32.gmra.mrb[0].mxu0 %v1558
        %v1653 = vpop.f32.mrb[0].mxu0
        %v1654 = vadd.f32 %v1526, %v1653
        %v1655 = vpop.f32.mrb[0].mxu0
        %1656 = vmatprep.mubr.f32.mxu0 0.0
        %1657 = vmatmul.mubr.f32.gmra.mrb[0].mxu0 %v1561
        %v1658 = vpop.f32.mrb[0].mxu0
        %v1659 = vadd.f32 %v1531, %v1658
        %v1660 = vpop.f32.mrb[0].mxu0
        %1661 = vmatprep.mubr.f32.mxu0 0.0
        %1662 = vmatmul.mubr.f32.gmra.mrb[0].mxu0 %v1564
        %v1663 = vpop.f32.mrb[0].mxu0
        %v1664 = vadd.f32 %v1536, %v1663
        %v1665 = vpop.f32.mrb[0].mxu0
        %1666 = vmatprep.mubr.f32.mxu0 0.0
        %1667 = vmatmul.mubr.f32.gmra.mrb[0].mxu0 %v1567
        %v1668 = vpop.f32.mrb[0].mxu0
        %v1669 = vadd.f32 %v1541, %v1668
        %v1670 = vpop.f32.mrb[0].mxu0
        %1671 = vmatprep.mubr.f32.mxu0 0.0
        %1672 = vmatmul.mubr.f32.gmra.mrb[0].mxu0 %v1570
        %v1673 = vpop.f32.mrb[0].mxu0
        %v1674 = vadd.f32 %v1546, %v1673
        %v1675 = vpop.f32.mrb[0].mxu0
        %1676 = vdwg.mxu0
        %v1677 = vmul.f32 %v1639, 1.442695
        %v1678 = vpow.pop %v1677
        %v1679 = vmul.f32 %v1644, 1.442695
        %v1680 = vpow.pop %v1679
        %v1681 = vmul.f32 %v1649, 1.442695
        %v1682 = vpow.pop %v1681
        %v1683 = vmul.f32 %v1654, 1.442695
        %v1684 = vpow.pop %v1683
        %v1685 = vmul.f32 %v1340, %v1678
        %v1686 = vmul.f32 %v1341, %v1680
        %v1687 = vmul.f32 %v1342, %v1682
        %v1688 = vmul.f32 %v1343, %v1684
        %v1689 = vadd.f32 %v1685, %v1659
        %v1690 = vadd.f32 %v1686, %v1664
        %v1691 = vadd.f32 %v1687, %v1669
        %v1692 = vadd.f32 %v1688, %v1674
        %v1693 = vadd.f32 %v1639, %v1644
        %v1694 = vadd.f32 %v1693, %v1649
        %v1695 = vadd.f32 %v1694, %v1654
        %v1696 = vrot.slane %v1695, 4
        %v1697 = vadd.f32 %v1695, %v1696
        %v1698 = vrot.slane %v1697, 2
        %v1699 = vadd.f32 %v1697, %v1698
        %v1700 = vrot.slane %v1699, 1
        %v1701 = vadd.f32 %v1699, %v1700
        %v1702 = vadd.f32 %v1353, %v1701
        %s1703 = scalar_lea.vmem %s296, 128 [#allocation3]
        %1704 = vst [vmem:[%s1703] sm:$0xff] %v1689
        %1705 = vst [vmem:[%s1703 + $0x8] sm:$0xff] %v1690
        %1706 = vst [vmem:[%s1703 + $0x10] sm:$0xff] %v1691
        %1707 = vst [vmem:[%s1703 + $0x18] sm:$0xff] %v1692
        %v1708 = vmul.f32 %v1689, %v1689
        %v1709 = vmul.f32 %v1690, %v1690
        %v1710 = vmul.f32 %v1691, %v1691
        %v1711 = vmul.f32 %v1692, %v1692
        %v1712 = vadd.f32 %v1708, %v1709
        %v1713 = vadd.f32 %v1712, %v1710
        %v1714 = vadd.f32 %v1713, %v1711
        %v1715 = vrot.slane %v1714, 4
        %v1716 = vadd.f32 %v1714, %v1715
        %v1717 = vrot.slane %v1716, 2
        %v1718 = vadd.f32 %v1716, %v1717
        %v1719 = vrot.slane %v1718, 1
        %v1720 = vadd.f32 %v1718, %v1719
        %v1721 = vmul.f32 %v1720, -0.5
        %v1722 = vsub.f32 %v1721, 29.406033
        %vm1723 = vcmask 1040384
        %v1724 = vsel %vm1723, %v1702, %v1722
        %1725 = vst [vmem:[%s306] sm:$0x3] %v1724
        %s1726 = sand.u32 %s139, 1
        %s1727 = scalar_lea.sflag [#allocation4], %s1726
        %s1728 = sand.u32 %s139, 1
        %s1729 = smul.addr %s1728, 160
        %s1730 = scalar_lea.vmem [#allocation3], %s1729
        %p1731 = scmp.lt.s32.totalorder %s21, 1
        %s1732 = scalar_select %p1731, %s21, 1
        %s1733 = smul.addr %s1732, 2
        %s1734 = scalar_lea.vmem %s6, %s1733
        // Predicated region
        $region79: #{normalizing_flow_model_forward.1} parent=73 // pred_check
          %p1735 = pneg %p149
        $region80: #{normalizing_flow_model_forward.1} parent=73 // pred_check_branch
          %1737 = sbr.rel (%p1735) target = $region82
        $region81: #{normalizing_flow_model_forward.1} parent=73 // pred_region
          %s1739 = ssub.s32 2560, 2560
          %1740 = vsyncadd %s1727, %s1739
          %s1741 = smul.addr %s21, 128
          %s1742 = scalar_lea.hbm %s5, %s1741
          %s1743 = sshll.u32 %s1730, 4
          %s1744 = int_to_ptr.vmem [resolvable:$true] %s1743
          %1749 = dma.vmem_to_hbm [thread:$0]  %s1744, 2560, %s1742, %s1727, 128, 256, 8
        $region82: #{normalizing_flow_model_forward.1} parent=73 // pred_fallthru
          _
        // Predicated region
        $region83: #{normalizing_flow_model_forward.1} parent=73 // pred_check
          %p1750 = pneg %p175
        $region84: #{normalizing_flow_model_forward.1} parent=73 // pred_check_branch
          %1752 = sbr.rel (%p1750) target = $region86
        $region85: #{normalizing_flow_model_forward.1} parent=73 // pred_region
          _
        $region86: #{normalizing_flow_model_forward.1} parent=73 // pred_fallthru
          _
      $region74: #{normalizing_flow_model_forward.1} parent=5 // pred_fallthru
        _
      %p1753 = scmp.le.s32.totalorder 2, %s16
      // Predicated region
      $region87: #{normalizing_flow_model_forward.1} parent=5 // pred_check
        %p1754 = pneg %p1753
      $region88: #{normalizing_flow_model_forward.1} parent=5 // pred_check_branch
        %1756 = sbr.rel (%p1754) target = $region90
      $region89: #{normalizing_flow_model_forward.1} parent=5 // pred_region
        %s1757 = ssub.s32 %s16, 2
        // Predicated region
        $region91: #{normalizing_flow_model_forward.1} parent=89 // pred_check
          %p1758 = pneg %p155
        $region92: #{normalizing_flow_model_forward.1} parent=89 // pred_check_branch
          %1760 = sbr.rel (%p1758) target = $region94
        $region93: #{normalizing_flow_model_forward.1} parent=89 // pred_region
          %s1761 = sand.u32 %s140, 1
          %s1762 = scalar_lea.sflag [#allocation4], %s1761
          %s1763 = sand.u32 %s140, 1
          %s1764 = smul.addr %s1763, 160
          %s1765 = scalar_lea.vmem [#allocation3], %s1764
          %1766 = dma.done %s1762, 2560
        $region94: #{normalizing_flow_model_forward.1} parent=89 // pred_fallthru
          _
        // Predicated region
        $region95: #{normalizing_flow_model_forward.1} parent=89 // pred_check
          %p1767 = pneg %p181
        $region96: #{normalizing_flow_model_forward.1} parent=89 // pred_check_branch
          %1769 = sbr.rel (%p1767) target = $region98
        $region97: #{normalizing_flow_model_forward.1} parent=89 // pred_region
          %p1770 = scmp.lt.s32.totalorder %s22, 1
          %s1771 = scalar_select %p1770, %s22, 1
          %s1772 = smul.addr %s1771, 2
          %s1773 = scalar_lea.vmem %s6, %s1772
        $region98: #{normalizing_flow_model_forward.1} parent=89 // pred_fallthru
          _
      $region90: #{normalizing_flow_model_forward.1} parent=5 // pred_fallthru
        _
    $region6: #{normalizing_flow_model_forward.1} parent=1 // loop_footer
      %s20 = sadd.s32 1, %s16
    $region7: #{normalizing_flow_model_forward.1} parent=1 // loop_footer_branch
      %15 = sbr.rel target = $region3
    $region8: #{normalizing_flow_model_forward.1} parent=1 // loop_exit
      _
    %1774 = vsyncpa [#allocation4], 1
    %s1775 = scalar_lea.sflag [#allocation4], 1
    %1776 = vsyncpa %s1775, 1

</llo_original>
